<compile_context>
chip_gen: v7x
topology: tpu7x:2x2x1
jax: 0.10.0
libtpu: 0.0.40
codegen_flags: <defaults>
</compile_context>

<pallas_src>
import functools

import jax
import jax.numpy as jnp
from jax.experimental import pallas as pl
from jax.experimental.pallas import tpu as pltpu

_NEG_BIG = -1e30       # mask value for non-edges (pre-softmax)
_M_INIT = -1e29        # online-softmax running-max init; strictly larger than
                       # _NEG_BIG so fully-masked kv blocks contribute exactly 0
_LEAKY_SLOPE = 0.2     # GATConv default negative_slope


def _pick_tile(n):
    """Largest tile in {512,256,128} that evenly divides n, else full extent."""
    for t in (512, 256, 128):
        if n % t == 0:
            return t
    # TODO(synk): pad N up to a multiple of 128 (the edge mask keeps padded
    # rows inert) instead of falling back to an untiled kernel for awkward N.
    return n


def _vmem_limit_bytes(tq, tk, total_heads, fout, rows_out):
    """Explicit scoped-VMEM budget; the kv tiling bounds it independent of N."""
    hf = total_heads * fout
    blocks = (2 * tk * tq                          # adj int8 (double buffered)
              + 2 * hf * tk * 2                    # (xW)^T bf16
              + 2 * (tk + tq) * total_heads * 4    # alpha blocks
              + 2 * rows_out * tq * 4              # output block
              + (2 * total_heads + hf) * tq * 4)   # m / l / acc scratch
    temps = 8 * tk * tq * 4                        # e / p / iota temporaries
    need = blocks + temps + (4 << 20)
    # Floor at 32 MiB (>= every generation's default scoped limit), cap at
    # 40 MiB so it stays safe on v7x's 64 MiB physical VMEM.
    return int(min(max(need, 32 << 20), 40 << 20))


# ---------------------------------------------------------------------------
# Kernel: online-softmax GAT attention + aggregation (transposed layout)
# ---------------------------------------------------------------------------
def _gat_attention_kernel(adst_ref, asrc_ref, xwt_ref, adj_ref, bias_ref,
                          out_ref, m_scr, l_scr, acc_scr,
                          *, fout, n_groups, heads_per_group, relu):
    total_heads = n_groups * heads_per_group
    tk, tq = adj_ref.shape
    i = pl.program_id(0)                 # target-node (row) tile
    k = pl.program_id(1)                 # source-node (kv) tile

    @pl.when(k == 0)
    def _init():
        m_scr[...] = jnp.full_like(m_scr, _M_INIT)
        l_scr[...] = jnp.zeros_like(l_scr)
        acc_scr[...] = jnp.zeros_like(acc_scr)

    # Edge mask for this (kv, row) block.  GATConv adds self-loops: build them
    # from global indices instead of materializing an N^2 f32 bias up front.
    src_ids = jax.lax.broadcasted_iota(jnp.int32, (tk, tq), 0) + k * tk
    dst_ids = jax.lax.broadcasted_iota(jnp.int32, (tk, tq), 1) + i * tq
    connected = jnp.logical_or(adj_ref[...] != 0, src_ids == dst_ids)

    asrc = asrc_ref[...]                 # [tk, H]   f32 source attention terms
    adst = adst_ref[...]                 # [H, tq]   f32 target attention terms
    xwt = xwt_ref[...]                   # [H*F, tk] bf16 projected sources

    for h in range(total_heads):
        e = asrc[:, h:h + 1] + adst[h:h + 1, :]          # [tk, tq]
        e = jnp.where(e > 0.0, e, _LEAKY_SLOPE * e)      # LeakyReLU(0.2), f32
        e = jnp.where(connected, e, _NEG_BIG)
        m_prev = m_scr[h:h + 1, :]                       # [1, tq]
        m_new = jnp.maximum(m_prev, jnp.max(e, axis=0, keepdims=True))
        corr = jnp.exp(m_prev - m_new)                   # rescale old state
        p = jnp.exp(e - m_new)                           # masked entries -> 0
        l_scr[h:h + 1, :] = (corr * l_scr[h:h + 1, :]
                             + jnp.sum(p, axis=0, keepdims=True))
        # Aggregation in transposed layout: [F, tk] @ [tk, tq] -> tq output
        # lanes (lane-dense on the MXU), f32 accumulation.
        agg = jnp.dot(xwt[h * fout:(h + 1) * fout, :], p.astype(jnp.bfloat16),
                      preferred_element_type=jnp.float32)
        acc_scr[h * fout:(h + 1) * fout, :] = (
            corr * acc_scr[h * fout:(h + 1) * fout, :] + agg)
        m_scr[h:h + 1, :] = m_new

    @pl.when(k == pl.num_programs(1) - 1)
    def _finalize():
        inv_l = 1.0 / l_scr[...]            # exact divide; runs once per row tile
        bias = bias_ref[...]
        scale = jnp.float32(1.0 / heads_per_group)
        for g in range(n_groups):
            res = jnp.zeros((fout, tq), jnp.float32)
            for j in range(heads_per_group):
                h = g * heads_per_group + j
                res = res + acc_scr[h * fout:(h + 1) * fout, :] * inv_l[h:h + 1, :]
            res = res * scale + bias[g * fout:(g + 1) * fout, :]
            if relu:
                res = jnp.maximum(res, 0.0)
            out_ref[g * fout:(g + 1) * fout, :] = res     # lane-dense store


# ---------------------------------------------------------------------------
# pallas_call wrapper
# ---------------------------------------------------------------------------
def _gat_attention(adj_i8, xw_t, alpha_src, alpha_dst_t, bias_col,
                   *, fout, n_groups, heads_per_group, relu):
    n = adj_i8.shape[0]
    total_heads = n_groups * heads_per_group
    rows_out = n_groups * fout
    tq = _pick_tile(n)
    tk = _pick_tile(n)
    kernel = functools.partial(_gat_attention_kernel, fout=fout,
                               n_groups=n_groups,
                               heads_per_group=heads_per_group, relu=relu)
    return pl.pallas_call(
        kernel,
        out_shape=jax.ShapeDtypeStruct((rows_out, n), jnp.float32),
        grid=(n // tq, n // tk),
        in_specs=[
            pl.BlockSpec((total_heads, tq), lambda i, k: (0, i)),          # alpha_dst^T
            pl.BlockSpec((tk, total_heads), lambda i, k: (k, 0)),          # alpha_src
            pl.BlockSpec((total_heads * fout, tk), lambda i, k: (0, k)),   # (xW)^T bf16
            pl.BlockSpec((tk, tq), lambda i, k: (k, i)),                   # adj int8 [src, dst]
            pl.BlockSpec((rows_out, 1), lambda i, k: (0, 0)),              # bias
        ],
        out_specs=pl.BlockSpec((rows_out, tq), lambda i, k: (0, i)),
        scratch_shapes=[
            pltpu.VMEM((total_heads, tq), jnp.float32),            # running max
            pltpu.VMEM((total_heads, tq), jnp.float32),            # running sum
            pltpu.VMEM((total_heads * fout, tq), jnp.float32),     # accumulator
        ],
        compiler_params=pltpu.CompilerParams(
            dimension_semantics=("parallel", "arbitrary"),
            vmem_limit_bytes=_vmem_limit_bytes(tq, tk, total_heads, fout, rows_out)),
    )(alpha_dst_t, alpha_src, xw_t, adj_i8, bias_col)


# ---------------------------------------------------------------------------
# Hoisted projection (one GEMM per layer, plain XLA)
# ---------------------------------------------------------------------------
def _project(x, w, att_src, att_dst):
    """Returns (xW)^T bf16 [H*F, N], alpha_src f32 [N, H], alpha_dst^T f32 [H, N]."""
    n = x.shape[0]
    heads, fout = att_src.shape
    xw = jnp.dot(x.astype(jnp.bfloat16), w.astype(jnp.bfloat16),
                 preferred_element_type=jnp.float32)                 # [N, H*F]
    xw_h = xw.reshape(n, heads, fout)
    alpha_src = jnp.einsum('nhf,hf->nh', xw_h, att_src)              # f32, tiny
    alpha_dst = jnp.einsum('nhf,hf->nh', xw_h, att_dst)              # f32, tiny
    return xw.T.astype(jnp.bfloat16), alpha_src, alpha_dst.T


def hidden_gat_encoder(x, adj, params):
    """Forward pass of HiddenGATEncoder: returns (mu, logvar)."""
    # Edge mask in [source, target] orientation, int8 (4x less HBM traffic than
    # an f32 additive bias); shared by all three GAT layers.
    adj_i8 = (adj.T != 0).astype(jnp.int8)

    # --- layer 1: GATConv(concat=True) + ReLU -------------------------------
    p1 = params["gat"]
    heads, f1 = p1["att_src"].shape
    xw_t, a_src, a_dst_t = _project(x, p1["w"], p1["att_src"], p1["att_dst"])
    hid_t = _gat_attention(adj_i8, xw_t, a_src, a_dst_t,
                           p1["bias"].reshape(-1, 1),
                           fout=f1, n_groups=heads, heads_per_group=1,
                           relu=True)                     # [heads*f1, N]
    hidden = hid_t.T                                      # [N, heads*f1]

    # --- layers 2+3: gat_mu / gat_logvar fused (concat=False, head mean) ----
    p_mu, p_lv = params["gat_mu"], params["gat_logvar"]
    heads2, f2 = p_mu["att_src"].shape
    w_cat = jnp.concatenate([p_mu["w"], p_lv["w"]], axis=1)
    att_src_cat = jnp.concatenate([p_mu["att_src"], p_lv["att_src"]], axis=0)
    att_dst_cat = jnp.concatenate([p_mu["att_dst"], p_lv["att_dst"]], axis=0)
    xw2_t, a_src2, a_dst2_t = _project(hidden, w_cat, att_src_cat, att_dst_cat)
    bias_pack = jnp.concatenate([p_mu["bias"].reshape(-1, 1),
                                 p_lv["bias"].reshape(-1, 1)], axis=0)
    out_t = _gat_attention(adj_i8, xw2_t, a_src2, a_dst2_t, bias_pack,
                           fout=f2, n_groups=2, heads_per_group=heads2,
                           relu=False)                    # [2*f2, N] = (mu | logvar)
    return out_t[:f2, :].T, out_t[f2:, :].T


# ---------------------------------------------------------------------------
# Parameter construction (arrays only -> safe to pass through jax.jit)
# ---------------------------------------------------------------------------
def _glorot(key, shape):
    fan = shape[0] + shape[-1]
    lim = (6.0 / fan) ** 0.5
    return jax.random.uniform(key, shape, jnp.float32, -lim, lim)


def make_gat_params(key, in_dim, out_dim, heads, concat):
    kw, ks, kd, kb = jax.random.split(key, 4)
    bias_cols = heads * out_dim if concat else out_dim
    return {
        "w": _glorot(kw, (in_dim, heads * out_dim)),
        "att_src": _glorot(ks, (heads, out_dim)),
        "att_dst": _glorot(kd, (heads, out_dim)),
        # small random bias so the bias path is actually exercised in the test
        "bias": 0.1 * jax.random.normal(kb, (1, bias_cols), jnp.float32),
    }


# ---------------------------------------------------------------------------
# Pure-JAX f32 reference (numerical self-check)
# ---------------------------------------------------------------------------
def _gat_ref(x, conn, p, concat, relu):
    heads, out_dim = p["att_src"].shape
    xw = x @ p["w"]
    outs = []
    for h in range(heads):
        xw_h = xw[:, h * out_dim:(h + 1) * out_dim]
        a_src = xw_h @ p["att_src"][h]
        a_dst = xw_h @ p["att_dst"][h]
        e = a_dst[:, None] + a_src[None, :]
        e = jnp.where(e > 0, e, _LEAKY_SLOPE * e)
        e = jnp.where(conn, e, _NEG_BIG)
        outs.append(jax.nn.softmax(e, axis=1) @ xw_h)
    out = jnp.concatenate(outs, axis=1) if concat else sum(outs) / heads
    out = out + p["bias"]
    return jnp.maximum(out, 0.0) if relu else out


def _encoder_ref(x, adj, params):
    n = adj.shape[0]
    conn = jnp.logical_or(adj != 0, jnp.eye(n, dtype=bool))   # + self-loops
    h = _gat_ref(x, conn, params["gat"], True, True)
    return (_gat_ref(h, conn, params["gat_mu"], False, False),
            _gat_ref(h, conn, params["gat_logvar"], False, False))


if __name__ == "__main__":
    def run_case(case_key, n, in_dim, h1, h2, heads, density):
        k_x, k_a, k1, k2, k3 = jax.random.split(case_key, 5)
        x = jax.random.normal(k_x, (n, in_dim), jnp.float32)
        a = (jax.random.uniform(k_a, (n, n)) < density).astype(jnp.float32)
        adj = jnp.maximum(a, a.T)          # symmetric dense adjacency
        params = {
            "gat": make_gat_params(k1, in_dim, h1, heads, concat=True),
            "gat_mu": make_gat_params(k2, heads * h1, h2, heads, concat=False),
            "gat_logvar": make_gat_params(k3, heads * h1, h2, heads, concat=False),
        }
        mu, logvar = jax.jit(hidden_gat_encoder)(x, adj, params)
        jax.block_until_ready((mu, logvar))
        assert mu.shape == (n, h2) and logvar.shape == (n, h2)
        assert bool(jnp.all(jnp.isfinite(mu))) and bool(jnp.all(jnp.isfinite(logvar)))
        mu_ref, lv_ref = _encoder_ref(x, adj, params)
        err = max(float(jnp.max(jnp.abs(mu - mu_ref))),
                  float(jnp.max(jnp.abs(logvar - lv_ref))))
        assert err < 0.15, f"mismatch vs f32 reference (N={n}): {err}"   # bf16 MXU tol

    key = jax.random.PRNGKey(0)
    k_small, k_big = jax.random.split(key)
    # Small case (single block), shapes consistent with the module defaults.
    run_case(k_small, n=8, in_dim=16, h1=8, h2=8, heads=3, density=0.4)
    # Larger, sparse case exercising the (row-tile x kv-tile) online-softmax
    # grid, including kv blocks with zero edges for some targets.
    run_case(k_big, n=384, in_dim=16, h1=8, h2=8, heads=3, density=0.01)
    print("KERNEL_OK")
</pallas_src>

<mosaic_0001>
module attributes {stable_mosaic.version = 11 : i64} {
  func.func @_gat_attention_kernel(%arg0: i32, %arg1: i32, %arg2: memref<3x8xf32, #tpu.memory_space<vmem>>, %arg3: memref<8x3xf32, #tpu.memory_space<vmem>>, %arg4: memref<24x8xbf16, #tpu.memory_space<vmem>>, %arg5: memref<8x8xi8, #tpu.memory_space<vmem>>, %arg6: memref<24x1xf32, #tpu.memory_space<vmem>>, %arg7: memref<24x8xf32, #tpu.memory_space<vmem>>, %arg8: memref<3x8xf32, #tpu.memory_space<vmem>>, %arg9: memref<3x8xf32, #tpu.memory_space<vmem>>, %arg10: memref<24x8xf32, #tpu.memory_space<vmem>>) attributes {dimension_semantics = [#tpu.dimension_semantics<parallel>, #tpu.dimension_semantics<arbitrary>], iteration_bounds = array<i64: 1, 1>, scalar_prefetch = 0 : i64, scratch_operands = 3 : i64, tpu.core_type = #tpu.core_type<tc>, window_params = [{transform_indices = @transform_0, window_bounds = array<i64: 3, 8>}, {transform_indices = @transform_1, window_bounds = array<i64: 8, 3>}, {transform_indices = @transform_2, window_bounds = array<i64: 24, 8>}, {transform_indices = @transform_3, window_bounds = array<i64: 8, 8>}, {pipeline_mode = #tpu.pipeline_mode<synchronous>, transform_indices = @transform_4, window_bounds = array<i64: 24, 1>}, {transform_indices = @transform_5, window_bounds = array<i64: 24, 8>}]} {
    %c0_i32 = arith.constant 0 : i32
    %0 = arith.cmpi eq, %arg1, %c0_i32 : i32
    %1 = arith.extui %0 : i1 to i32
    %c0_i32_0 = arith.constant 0 : i32
    %2 = arith.cmpi ne, %1, %c0_i32_0 : i32
    scf.if %2 {
      %cst_60 = arith.constant -1.000000e+29 : f32
      %130 = vector.broadcast %cst_60 : f32 to vector<3x8xf32>
      %c0_61 = arith.constant 0 : index
      %c0_62 = arith.constant 0 : index
      %131 = vector.load %arg8[%c0_61, %c0_62] : memref<3x8xf32, #tpu.memory_space<vmem>>, vector<3x8xf32>
      tpu.vector_store %arg8[%c0_61, %c0_62], %130 {strides = array<i32>} : memref<3x8xf32, #tpu.memory_space<vmem>>, vector<3x8xf32>,
      %cst_63 = arith.constant 0.000000e+00 : f32
      %132 = vector.broadcast %cst_63 : f32 to vector<3x8xf32>
      %c0_64 = arith.constant 0 : index
      %c0_65 = arith.constant 0 : index
      %133 = vector.load %arg9[%c0_64, %c0_65] : memref<3x8xf32, #tpu.memory_space<vmem>>, vector<3x8xf32>
      tpu.vector_store %arg9[%c0_64, %c0_65], %132 {strides = array<i32>} : memref<3x8xf32, #tpu.memory_space<vmem>>, vector<3x8xf32>,
      %cst_66 = arith.constant 0.000000e+00 : f32
      %134 = vector.broadcast %cst_66 : f32 to vector<24x8xf32>
      %c0_67 = arith.constant 0 : index
      %c0_68 = arith.constant 0 : index
      %135 = vector.load %arg10[%c0_67, %c0_68] : memref<24x8xf32, #tpu.memory_space<vmem>>, vector<24x8xf32>
      tpu.vector_store %arg10[%c0_67, %c0_68], %134 {strides = array<i32>} : memref<24x8xf32, #tpu.memory_space<vmem>>, vector<24x8xf32>,
    } else {
    }
    %3 = tpu.iota {dimensions = array<i32: 0>} : vector<8x8xi32>
    %c8_i32 = arith.constant 8 : i32
    %4 = arith.muli %arg1, %c8_i32 : i32
    %5 = vector.broadcast %4 : i32 to vector<8x8xi32>
    %6 = arith.addi %3, %5 : vector<8x8xi32>
    %7 = tpu.iota {dimensions = array<i32: 1>} : vector<8x8xi32>
    %c8_i32_1 = arith.constant 8 : i32
    %8 = arith.muli %arg0, %c8_i32_1 : i32
    %9 = vector.broadcast %8 : i32 to vector<8x8xi32>
    %10 = arith.addi %7, %9 : vector<8x8xi32>
    %c0 = arith.constant 0 : index
    %c0_2 = arith.constant 0 : index
    %11 = vector.load %arg5[%c0, %c0_2] : memref<8x8xi8, #tpu.memory_space<vmem>>, vector<8x8xi8>
    %c0_i8 = arith.constant 0 : i8
    %12 = vector.broadcast %c0_i8 : i8 to vector<8x8xi8>
    %13 = arith.cmpi ne, %11, %12 : vector<8x8xi8>
    %14 = arith.cmpi eq, %6, %10 : vector<8x8xi32>
    %15 = arith.ori %13, %14 : vector<8x8xi1>
    %c0_3 = arith.constant 0 : index
    %c0_4 = arith.constant 0 : index
    %16 = vector.load %arg3[%c0_3, %c0_4] : memref<8x3xf32, #tpu.memory_space<vmem>>, vector<8x3xf32>
    %c0_5 = arith.constant 0 : index
    %c0_6 = arith.constant 0 : index
    %17 = vector.load %arg2[%c0_5, %c0_6] : memref<3x8xf32, #tpu.memory_space<vmem>>, vector<3x8xf32>
    %c0_7 = arith.constant 0 : index
    %c0_8 = arith.constant 0 : index
    %18 = vector.load %arg4[%c0_7, %c0_8] : memref<24x8xbf16, #tpu.memory_space<vmem>>, vector<24x8xbf16>
    %19 = vector.extract_strided_slice %16 {offsets = [0, 0], sizes = [8, 1], strides = [1, 1]} : vector<8x3xf32> to vector<8x1xf32>
    %20 = vector.extract_strided_slice %17 {offsets = [0, 0], sizes = [1, 8], strides = [1, 1]} : vector<3x8xf32> to vector<1x8xf32>
    %21 = vector.broadcast %19 : vector<8x1xf32> to vector<8x8xf32>
    %22 = vector.broadcast %20 : vector<1x8xf32> to vector<8x8xf32>
    %23 = arith.addf %21, %22 : vector<8x8xf32>
    %cst = arith.constant 0.000000e+00 : f32
    %24 = vector.broadcast %cst : f32 to vector<8x8xf32>
    %25 = arith.cmpf ogt, %23, %24 : vector<8x8xf32>
    %cst_9 = arith.constant 2.000000e-01 : f32
    %26 = vector.broadcast %cst_9 : f32 to vector<8x8xf32>
    %27 = arith.mulf %26, %23 : vector<8x8xf32>
    %28 = arith.select %25, %23, %27 : vector<8x8xi1>, vector<8x8xf32>
    %cst_10 = arith.constant -1.000000e+30 : f32
    %29 = vector.broadcast %cst_10 : f32 to vector<8x8xf32>
    %30 = arith.select %15, %28, %29 : vector<8x8xi1>, vector<8x8xf32>
    %c0_11 = arith.constant 0 : index
    %c0_12 = arith.constant 0 : index
    %31 = vector.load %arg8[%c0_11, %c0_12] : memref<3x8xf32, #tpu.memory_space<vmem>>, vector<1x8xf32>
    %cst_13 = arith.constant dense<0xFF800000> : vector<8xf32>
    %32 = vector.multi_reduction <maximumf>, %30, %cst_13 [0] : vector<8x8xf32> to vector<8xf32>
    %33 = vector.shape_cast %32 : vector<8xf32> to vector<1x8xf32>
    %34 = arith.maximumf %31, %33 : vector<1x8xf32>
    %35 = arith.subf %31, %34 : vector<1x8xf32>
    %36 = math.exp %35 : vector<1x8xf32>
    %37 = vector.broadcast %34 : vector<1x8xf32> to vector<8x8xf32>
    %38 = arith.subf %30, %37 : vector<8x8xf32>
    %39 = math.exp %38 : vector<8x8xf32>
    %c0_14 = arith.constant 0 : index
    %c0_15 = arith.constant 0 : index
    %40 = vector.load %arg9[%c0_14, %c0_15] : memref<3x8xf32, #tpu.memory_space<vmem>>, vector<1x8xf32>
    %41 = arith.mulf %36, %40 : vector<1x8xf32>
    %cst_16 = arith.constant dense<0.000000e+00> : vector<8xf32>
    %42 = vector.multi_reduction <add>, %39, %cst_16 [0] : vector<8x8xf32> to vector<8xf32>
    %43 = vector.shape_cast %42 : vector<8xf32> to vector<1x8xf32>
    %44 = arith.addf %41, %43 : vector<1x8xf32>
    %c0_17 = arith.constant 0 : index
    %c0_18 = arith.constant 0 : index
    %45 = vector.load %arg9[%c0_17, %c0_18] : memref<3x8xf32, #tpu.memory_space<vmem>>, vector<1x8xf32>
    tpu.vector_store %arg9[%c0_17, %c0_18], %44 {strides = array<i32>} : memref<3x8xf32, #tpu.memory_space<vmem>>, vector<1x8xf32>,
    %46 = vector.extract_strided_slice %18 {offsets = [0, 0], sizes = [8, 8], strides = [1, 1]} : vector<24x8xbf16> to vector<8x8xbf16>
    %47 = arith.truncf %39 : vector<8x8xf32> to vector<8x8xbf16>
    %cst_19 = arith.constant dense<0.000000e+00> : vector<8x8xf32>
    %48 = tpu.matmul %46, %47, %cst_19 {dimension_numbers = #tpu.dot_dimension_numbers<[1], [0], [0], [1], [0, 0, 1, 1], [], []>} : vector<8x8xbf16>, vector<8x8xbf16>, vector<8x8xf32> -> vector<8x8xf32>
    %c0_20 = arith.constant 0 : index
    %c0_21 = arith.constant 0 : index
    %49 = vector.load %arg10[%c0_20, %c0_21] : memref<24x8xf32, #tpu.memory_space<vmem>>, vector<8x8xf32>
    %50 = vector.broadcast %36 : vector<1x8xf32> to vector<8x8xf32>
    %51 = arith.mulf %50, %49 : vector<8x8xf32>
    %52 = arith.addf %51, %48 : vector<8x8xf32>
    %c0_22 = arith.constant 0 : index
    %c0_23 = arith.constant 0 : index
    %53 = vector.load %arg10[%c0_22, %c0_23] : memref<24x8xf32, #tpu.memory_space<vmem>>, vector<8x8xf32>
    tpu.vector_store %arg10[%c0_22, %c0_23], %52 {strides = array<i32>} : memref<24x8xf32, #tpu.memory_space<vmem>>, vector<8x8xf32>,
    %c0_24 = arith.constant 0 : index
    %c0_25 = arith.constant 0 : index
    %54 = vector.load %arg8[%c0_24, %c0_25] : memref<3x8xf32, #tpu.memory_space<vmem>>, vector<1x8xf32>
    tpu.vector_store %arg8[%c0_24, %c0_25], %34 {strides = array<i32>} : memref<3x8xf32, #tpu.memory_space<vmem>>, vector<1x8xf32>,
    %55 = vector.extract_strided_slice %16 {offsets = [0, 1], sizes = [8, 1], strides = [1, 1]} : vector<8x3xf32> to vector<8x1xf32>
    %56 = vector.extract_strided_slice %17 {offsets = [1, 0], sizes = [1, 8], strides = [1, 1]} : vector<3x8xf32> to vector<1x8xf32>
    %57 = vector.broadcast %55 : vector<8x1xf32> to vector<8x8xf32>
    %58 = vector.broadcast %56 : vector<1x8xf32> to vector<8x8xf32>
    %59 = arith.addf %57, %58 : vector<8x8xf32>
    %cst_26 = arith.constant 0.000000e+00 : f32
    %60 = vector.broadcast %cst_26 : f32 to vector<8x8xf32>
    %61 = arith.cmpf ogt, %59, %60 : vector<8x8xf32>
    %cst_27 = arith.constant 2.000000e-01 : f32
    %62 = vector.broadcast %cst_27 : f32 to vector<8x8xf32>
    %63 = arith.mulf %62, %59 : vector<8x8xf32>
    %64 = arith.select %61, %59, %63 : vector<8x8xi1>, vector<8x8xf32>
    %cst_28 = arith.constant -1.000000e+30 : f32
    %65 = vector.broadcast %cst_28 : f32 to vector<8x8xf32>
    %66 = arith.select %15, %64, %65 : vector<8x8xi1>, vector<8x8xf32>
    %c1 = arith.constant 1 : index
    %c0_29 = arith.constant 0 : index
    %67 = vector.load %arg8[%c1, %c0_29] : memref<3x8xf32, #tpu.memory_space<vmem>>, vector<1x8xf32>
    %cst_30 = arith.constant dense<0xFF800000> : vector<8xf32>
    %68 = vector.multi_reduction <maximumf>, %66, %cst_30 [0] : vector<8x8xf32> to vector<8xf32>
    %69 = vector.shape_cast %68 : vector<8xf32> to vector<1x8xf32>
    %70 = arith.maximumf %67, %69 : vector<1x8xf32>
    %71 = arith.subf %67, %70 : vector<1x8xf32>
    %72 = math.exp %71 : vector<1x8xf32>
    %73 = vector.broadcast %70 : vector<1x8xf32> to vector<8x8xf32>
    %74 = arith.subf %66, %73 : vector<8x8xf32>
    %75 = math.exp %74 : vector<8x8xf32>
    %c1_31 = arith.constant 1 : index
    %c0_32 = arith.constant 0 : index
    %76 = vector.load %arg9[%c1_31, %c0_32] : memref<3x8xf32, #tpu.memory_space<vmem>>, vector<1x8xf32>
    %77 = arith.mulf %72, %76 : vector<1x8xf32>
    %cst_33 = arith.constant dense<0.000000e+00> : vector<8xf32>
    %78 = vector.multi_reduction <add>, %75, %cst_33 [0] : vector<8x8xf32> to vector<8xf32>
    %79 = vector.shape_cast %78 : vector<8xf32> to vector<1x8xf32>
    %80 = arith.addf %77, %79 : vector<1x8xf32>
    %c1_34 = arith.constant 1 : index
    %c0_35 = arith.constant 0 : index
    %81 = vector.load %arg9[%c1_34, %c0_35] : memref<3x8xf32, #tpu.memory_space<vmem>>, vector<1x8xf32>
    tpu.vector_store %arg9[%c1_34, %c0_35], %80 {strides = array<i32>} : memref<3x8xf32, #tpu.memory_space<vmem>>, vector<1x8xf32>,
    %82 = vector.extract_strided_slice %18 {offsets = [8, 0], sizes = [8, 8], strides = [1, 1]} : vector<24x8xbf16> to vector<8x8xbf16>
    %83 = arith.truncf %75 : vector<8x8xf32> to vector<8x8xbf16>
    %cst_36 = arith.constant dense<0.000000e+00> : vector<8x8xf32>
    %84 = tpu.matmul %82, %83, %cst_36 {dimension_numbers = #tpu.dot_dimension_numbers<[1], [0], [0], [1], [0, 0, 1, 1], [], []>} : vector<8x8xbf16>, vector<8x8xbf16>, vector<8x8xf32> -> vector<8x8xf32>
    %c8 = arith.constant 8 : index
    %c0_37 = arith.constant 0 : index
    %85 = vector.load %arg10[%c8, %c0_37] : memref<24x8xf32, #tpu.memory_space<vmem>>, vector<8x8xf32>
    %86 = vector.broadcast %72 : vector<1x8xf32> to vector<8x8xf32>
    %87 = arith.mulf %86, %85 : vector<8x8xf32>
    %88 = arith.addf %87, %84 : vector<8x8xf32>
    %c8_38 = arith.constant 8 : index
    %c0_39 = arith.constant 0 : index
    %89 = vector.load %arg10[%c8_38, %c0_39] : memref<24x8xf32, #tpu.memory_space<vmem>>, vector<8x8xf32>
    tpu.vector_store %arg10[%c8_38, %c0_39], %88 {strides = array<i32>} : memref<24x8xf32, #tpu.memory_space<vmem>>, vector<8x8xf32>,
    %c1_40 = arith.constant 1 : index
    %c0_41 = arith.constant 0 : index
    %90 = vector.load %arg8[%c1_40, %c0_41] : memref<3x8xf32, #tpu.memory_space<vmem>>, vector<1x8xf32>
    tpu.vector_store %arg8[%c1_40, %c0_41], %70 {strides = array<i32>} : memref<3x8xf32, #tpu.memory_space<vmem>>, vector<1x8xf32>,
    %91 = vector.extract_strided_slice %16 {offsets = [0, 2], sizes = [8, 1], strides = [1, 1]} : vector<8x3xf32> to vector<8x1xf32>
    %92 = vector.extract_strided_slice %17 {offsets = [2, 0], sizes = [1, 8], strides = [1, 1]} : vector<3x8xf32> to vector<1x8xf32>
    %93 = vector.broadcast %91 : vector<8x1xf32> to vector<8x8xf32>
    %94 = vector.broadcast %92 : vector<1x8xf32> to vector<8x8xf32>
    %95 = arith.addf %93, %94 : vector<8x8xf32>
    %cst_42 = arith.constant 0.000000e+00 : f32
    %96 = vector.broadcast %cst_42 : f32 to vector<8x8xf32>
    %97 = arith.cmpf ogt, %95, %96 : vector<8x8xf32>
    %cst_43 = arith.constant 2.000000e-01 : f32
    %98 = vector.broadcast %cst_43 : f32 to vector<8x8xf32>
    %99 = arith.mulf %98, %95 : vector<8x8xf32>
    %100 = arith.select %97, %95, %99 : vector<8x8xi1>, vector<8x8xf32>
    %cst_44 = arith.constant -1.000000e+30 : f32
    %101 = vector.broadcast %cst_44 : f32 to vector<8x8xf32>
    %102 = arith.select %15, %100, %101 : vector<8x8xi1>, vector<8x8xf32>
    %c2 = arith.constant 2 : index
    %c0_45 = arith.constant 0 : index
    %103 = vector.load %arg8[%c2, %c0_45] : memref<3x8xf32, #tpu.memory_space<vmem>>, vector<1x8xf32>
    %cst_46 = arith.constant dense<0xFF800000> : vector<8xf32>
    %104 = vector.multi_reduction <maximumf>, %102, %cst_46 [0] : vector<8x8xf32> to vector<8xf32>
    %105 = vector.shape_cast %104 : vector<8xf32> to vector<1x8xf32>
    %106 = arith.maximumf %103, %105 : vector<1x8xf32>
    %107 = arith.subf %103, %106 : vector<1x8xf32>
    %108 = math.exp %107 : vector<1x8xf32>
    %109 = vector.broadcast %106 : vector<1x8xf32> to vector<8x8xf32>
    %110 = arith.subf %102, %109 : vector<8x8xf32>
    %111 = math.exp %110 : vector<8x8xf32>
    %c2_47 = arith.constant 2 : index
    %c0_48 = arith.constant 0 : index
    %112 = vector.load %arg9[%c2_47, %c0_48] : memref<3x8xf32, #tpu.memory_space<vmem>>, vector<1x8xf32>
    %113 = arith.mulf %108, %112 : vector<1x8xf32>
    %cst_49 = arith.constant dense<0.000000e+00> : vector<8xf32>
    %114 = vector.multi_reduction <add>, %111, %cst_49 [0] : vector<8x8xf32> to vector<8xf32>
    %115 = vector.shape_cast %114 : vector<8xf32> to vector<1x8xf32>
    %116 = arith.addf %113, %115 : vector<1x8xf32>
    %c2_50 = arith.constant 2 : index
    %c0_51 = arith.constant 0 : index
    %117 = vector.load %arg9[%c2_50, %c0_51] : memref<3x8xf32, #tpu.memory_space<vmem>>, vector<1x8xf32>
    tpu.vector_store %arg9[%c2_50, %c0_51], %116 {strides = array<i32>} : memref<3x8xf32, #tpu.memory_space<vmem>>, vector<1x8xf32>,
    %118 = vector.extract_strided_slice %18 {offsets = [16, 0], sizes = [8, 8], strides = [1, 1]} : vector<24x8xbf16> to vector<8x8xbf16>
    %119 = arith.truncf %111 : vector<8x8xf32> to vector<8x8xbf16>
    %cst_52 = arith.constant dense<0.000000e+00> : vector<8x8xf32>
    %120 = tpu.matmul %118, %119, %cst_52 {dimension_numbers = #tpu.dot_dimension_numbers<[1], [0], [0], [1], [0, 0, 1, 1], [], []>} : vector<8x8xbf16>, vector<8x8xbf16>, vector<8x8xf32> -> vector<8x8xf32>
    %c16 = arith.constant 16 : index
    %c0_53 = arith.constant 0 : index
    %121 = vector.load %arg10[%c16, %c0_53] : memref<24x8xf32, #tpu.memory_space<vmem>>, vector<8x8xf32>
    %122 = vector.broadcast %108 : vector<1x8xf32> to vector<8x8xf32>
    %123 = arith.mulf %122, %121 : vector<8x8xf32>
    %124 = arith.addf %123, %120 : vector<8x8xf32>
    %c16_54 = arith.constant 16 : index
    %c0_55 = arith.constant 0 : index
    %125 = vector.load %arg10[%c16_54, %c0_55] : memref<24x8xf32, #tpu.memory_space<vmem>>, vector<8x8xf32>
    tpu.vector_store %arg10[%c16_54, %c0_55], %124 {strides = array<i32>} : memref<24x8xf32, #tpu.memory_space<vmem>>, vector<8x8xf32>,
    %c2_56 = arith.constant 2 : index
    %c0_57 = arith.constant 0 : index
    %126 = vector.load %arg8[%c2_56, %c0_57] : memref<3x8xf32, #tpu.memory_space<vmem>>, vector<1x8xf32>
    tpu.vector_store %arg8[%c2_56, %c0_57], %106 {strides = array<i32>} : memref<3x8xf32, #tpu.memory_space<vmem>>, vector<1x8xf32>,
    %c0_i32_58 = arith.constant 0 : i32
    %127 = arith.cmpi eq, %arg1, %c0_i32_58 : i32
    %128 = arith.extui %127 : i1 to i32
    %c0_i32_59 = arith.constant 0 : i32
    %129 = arith.cmpi ne, %128, %c0_i32_59 : i32
    scf.if %129 {
      %c0_60 = arith.constant 0 : index
      %c0_61 = arith.constant 0 : index
      %130 = vector.load %arg9[%c0_60, %c0_61] : memref<3x8xf32, #tpu.memory_space<vmem>>, vector<3x8xf32>
      %cst_62 = arith.constant 1.000000e+00 : f32
      %131 = vector.broadcast %cst_62 : f32 to vector<3x8xf32>
      %132 = arith.divf %131, %130 : vector<3x8xf32>
      %c0_63 = arith.constant 0 : index
      %c0_64 = arith.constant 0 : index
      %133 = vector.load %arg6[%c0_63, %c0_64] : memref<24x1xf32, #tpu.memory_space<vmem>>, vector<24x1xf32>
      %cst_65 = arith.constant 0.000000e+00 : f32
      %134 = vector.broadcast %cst_65 : f32 to vector<8x8xf32>
      %c0_66 = arith.constant 0 : index
      %c0_67 = arith.constant 0 : index
      %135 = vector.load %arg10[%c0_66, %c0_67] : memref<24x8xf32, #tpu.memory_space<vmem>>, vector<8x8xf32>
      %136 = vector.extract_strided_slice %132 {offsets = [0, 0], sizes = [1, 8], strides = [1, 1]} : vector<3x8xf32> to vector<1x8xf32>
      %137 = vector.broadcast %136 : vector<1x8xf32> to vector<8x8xf32>
      %138 = arith.mulf %135, %137 : vector<8x8xf32>
      %139 = arith.addf %134, %138 : vector<8x8xf32>
      %cst_68 = arith.constant 1.000000e+00 : f32
      %140 = vector.broadcast %cst_68 : f32 to vector<8x8xf32>
      %141 = arith.mulf %139, %140 : vector<8x8xf32>
      %142 = vector.extract_strided_slice %133 {offsets = [0, 0], sizes = [8, 1], strides = [1, 1]} : vector<24x1xf32> to vector<8x1xf32>
      %143 = vector.broadcast %142 : vector<8x1xf32> to vector<8x8xf32>
      %144 = arith.addf %141, %143 : vector<8x8xf32>
      %cst_69 = arith.constant 0.000000e+00 : f32
      %145 = vector.broadcast %cst_69 : f32 to vector<8x8xf32>
      %146 = arith.maximumf %144, %145 : vector<8x8xf32>
      %c0_70 = arith.constant 0 : index
      %c0_71 = arith.constant 0 : index
      %147 = vector.load %arg7[%c0_70, %c0_71] : memref<24x8xf32, #tpu.memory_space<vmem>>, vector<8x8xf32>
      tpu.vector_store %arg7[%c0_70, %c0_71], %146 {strides = array<i32>} : memref<24x8xf32, #tpu.memory_space<vmem>>, vector<8x8xf32>,
      %cst_72 = arith.constant 0.000000e+00 : f32
      %148 = vector.broadcast %cst_72 : f32 to vector<8x8xf32>
      %c8_73 = arith.constant 8 : index
      %c0_74 = arith.constant 0 : index
      %149 = vector.load %arg10[%c8_73, %c0_74] : memref<24x8xf32, #tpu.memory_space<vmem>>, vector<8x8xf32>
      %150 = vector.extract_strided_slice %132 {offsets = [1, 0], sizes = [1, 8], strides = [1, 1]} : vector<3x8xf32> to vector<1x8xf32>
      %151 = vector.broadcast %150 : vector<1x8xf32> to vector<8x8xf32>
      %152 = arith.mulf %149, %151 : vector<8x8xf32>
      %153 = arith.addf %148, %152 : vector<8x8xf32>
      %cst_75 = arith.constant 1.000000e+00 : f32
      %154 = vector.broadcast %cst_75 : f32 to vector<8x8xf32>
      %155 = arith.mulf %153, %154 : vector<8x8xf32>
      %156 = vector.extract_strided_slice %133 {offsets = [8, 0], sizes = [8, 1], strides = [1, 1]} : vector<24x1xf32> to vector<8x1xf32>
      %157 = vector.broadcast %156 : vector<8x1xf32> to vector<8x8xf32>
      %158 = arith.addf %155, %157 : vector<8x8xf32>
      %cst_76 = arith.constant 0.000000e+00 : f32
      %159 = vector.broadcast %cst_76 : f32 to vector<8x8xf32>
      %160 = arith.maximumf %158, %159 : vector<8x8xf32>
      %c8_77 = arith.constant 8 : index
      %c0_78 = arith.constant 0 : index
      %161 = vector.load %arg7[%c8_77, %c0_78] : memref<24x8xf32, #tpu.memory_space<vmem>>, vector<8x8xf32>
      tpu.vector_store %arg7[%c8_77, %c0_78], %160 {strides = array<i32>} : memref<24x8xf32, #tpu.memory_space<vmem>>, vector<8x8xf32>,
      %cst_79 = arith.constant 0.000000e+00 : f32
      %162 = vector.broadcast %cst_79 : f32 to vector<8x8xf32>
      %c16_80 = arith.constant 16 : index
      %c0_81 = arith.constant 0 : index
      %163 = vector.load %arg10[%c16_80, %c0_81] : memref<24x8xf32, #tpu.memory_space<vmem>>, vector<8x8xf32>
      %164 = vector.extract_strided_slice %132 {offsets = [2, 0], sizes = [1, 8], strides = [1, 1]} : vector<3x8xf32> to vector<1x8xf32>
      %165 = vector.broadcast %164 : vector<1x8xf32> to vector<8x8xf32>
      %166 = arith.mulf %163, %165 : vector<8x8xf32>
      %167 = arith.addf %162, %166 : vector<8x8xf32>
      %cst_82 = arith.constant 1.000000e+00 : f32
      %168 = vector.broadcast %cst_82 : f32 to vector<8x8xf32>
      %169 = arith.mulf %167, %168 : vector<8x8xf32>
      %170 = vector.extract_strided_slice %133 {offsets = [16, 0], sizes = [8, 1], strides = [1, 1]} : vector<24x1xf32> to vector<8x1xf32>
      %171 = vector.broadcast %170 : vector<8x1xf32> to vector<8x8xf32>
      %172 = arith.addf %169, %171 : vector<8x8xf32>
      %cst_83 = arith.constant 0.000000e+00 : f32
      %173 = vector.broadcast %cst_83 : f32 to vector<8x8xf32>
      %174 = arith.maximumf %172, %173 : vector<8x8xf32>
      %c16_84 = arith.constant 16 : index
      %c0_85 = arith.constant 0 : index
      %175 = vector.load %arg7[%c16_84, %c0_85] : memref<24x8xf32, #tpu.memory_space<vmem>>, vector<8x8xf32>
      tpu.vector_store %arg7[%c16_84, %c0_85], %174 {strides = array<i32>} : memref<24x8xf32, #tpu.memory_space<vmem>>, vector<8x8xf32>,
    } else {
    }
    return
  }
  func.func @transform_0(%arg0: i32, %arg1: i32) -> (i32, i32) {
    %c0_i32 = arith.constant 0 : i32
    %c0_i32_0 = arith.constant 0 : i32
    return %c0_i32, %arg0 : i32, i32
  }
  func.func @transform_1(%arg0: i32, %arg1: i32) -> (i32, i32) {
    %c0_i32 = arith.constant 0 : i32
    %c0_i32_0 = arith.constant 0 : i32
    return %arg1, %c0_i32 : i32, i32
  }
  func.func @transform_2(%arg0: i32, %arg1: i32) -> (i32, i32) {
    %c0_i32 = arith.constant 0 : i32
    %c0_i32_0 = arith.constant 0 : i32
    return %c0_i32, %arg1 : i32, i32
  }
  func.func @transform_3(%arg0: i32, %arg1: i32) -> (i32, i32) {
    %c0_i32 = arith.constant 0 : i32
    return %arg1, %arg0 : i32, i32
  }
  func.func @transform_4(%arg0: i32, %arg1: i32) -> (i32, i32) {
    %c0_i32 = arith.constant 0 : i32
    %c0_i32_0 = arith.constant 0 : i32
    %c0_i32_1 = arith.constant 0 : i32
    return %c0_i32, %c0_i32_0 : i32, i32
  }
  func.func @transform_5(%arg0: i32, %arg1: i32) -> (i32, i32) {
    %c0_i32 = arith.constant 0 : i32
    %c0_i32_0 = arith.constant 0 : i32
    return %c0_i32, %arg0 : i32, i32
  }
}

module attributes {stable_mosaic.version = 11 : i64} {
  func.func @_gat_attention_kernel(%arg0: i32, %arg1: i32, %arg2: memref<6x8xf32, #tpu.memory_space<vmem>>, %arg3: memref<8x6xf32, #tpu.memory_space<vmem>>, %arg4: memref<48x8xbf16, #tpu.memory_space<vmem>>, %arg5: memref<8x8xi8, #tpu.memory_space<vmem>>, %arg6: memref<16x1xf32, #tpu.memory_space<vmem>>, %arg7: memref<16x8xf32, #tpu.memory_space<vmem>>, %arg8: memref<6x8xf32, #tpu.memory_space<vmem>>, %arg9: memref<6x8xf32, #tpu.memory_space<vmem>>, %arg10: memref<48x8xf32, #tpu.memory_space<vmem>>) attributes {dimension_semantics = [#tpu.dimension_semantics<parallel>, #tpu.dimension_semantics<arbitrary>], iteration_bounds = array<i64: 1, 1>, scalar_prefetch = 0 : i64, scratch_operands = 3 : i64, tpu.core_type = #tpu.core_type<tc>, window_params = [{transform_indices = @transform_0, window_bounds = array<i64: 6, 8>}, {transform_indices = @transform_1, window_bounds = array<i64: 8, 6>}, {transform_indices = @transform_2, window_bounds = array<i64: 48, 8>}, {transform_indices = @transform_3, window_bounds = array<i64: 8, 8>}, {pipeline_mode = #tpu.pipeline_mode<synchronous>, transform_indices = @transform_4, window_bounds = array<i64: 16, 1>}, {transform_indices = @transform_5, window_bounds = array<i64: 16, 8>}]} {
    %c0_i32 = arith.constant 0 : i32
    %0 = arith.cmpi eq, %arg1, %c0_i32 : i32
    %1 = arith.extui %0 : i1 to i32
    %c0_i32_0 = arith.constant 0 : i32
    %2 = arith.cmpi ne, %1, %c0_i32_0 : i32
    scf.if %2 {
      %cst_108 = arith.constant -1.000000e+29 : f32
      %238 = vector.broadcast %cst_108 : f32 to vector<6x8xf32>
      %c0_109 = arith.constant 0 : index
      %c0_110 = arith.constant 0 : index
      %239 = vector.load %arg8[%c0_109, %c0_110] : memref<6x8xf32, #tpu.memory_space<vmem>>, vector<6x8xf32>
      tpu.vector_store %arg8[%c0_109, %c0_110], %238 {strides = array<i32>} : memref<6x8xf32, #tpu.memory_space<vmem>>, vector<6x8xf32>,
      %cst_111 = arith.constant 0.000000e+00 : f32
      %240 = vector.broadcast %cst_111 : f32 to vector<6x8xf32>
      %c0_112 = arith.constant 0 : index
      %c0_113 = arith.constant 0 : index
      %241 = vector.load %arg9[%c0_112, %c0_113] : memref<6x8xf32, #tpu.memory_space<vmem>>, vector<6x8xf32>
      tpu.vector_store %arg9[%c0_112, %c0_113], %240 {strides = array<i32>} : memref<6x8xf32, #tpu.memory_space<vmem>>, vector<6x8xf32>,
      %cst_114 = arith.constant 0.000000e+00 : f32
      %242 = vector.broadcast %cst_114 : f32 to vector<48x8xf32>
      %c0_115 = arith.constant 0 : index
      %c0_116 = arith.constant 0 : index
      %243 = vector.load %arg10[%c0_115, %c0_116] : memref<48x8xf32, #tpu.memory_space<vmem>>, vector<48x8xf32>
      tpu.vector_store %arg10[%c0_115, %c0_116], %242 {strides = array<i32>} : memref<48x8xf32, #tpu.memory_space<vmem>>, vector<48x8xf32>,
    } else {
    }
    %3 = tpu.iota {dimensions = array<i32: 0>} : vector<8x8xi32>
    %c8_i32 = arith.constant 8 : i32
    %4 = arith.muli %arg1, %c8_i32 : i32
    %5 = vector.broadcast %4 : i32 to vector<8x8xi32>
    %6 = arith.addi %3, %5 : vector<8x8xi32>
    %7 = tpu.iota {dimensions = array<i32: 1>} : vector<8x8xi32>
    %c8_i32_1 = arith.constant 8 : i32
    %8 = arith.muli %arg0, %c8_i32_1 : i32
    %9 = vector.broadcast %8 : i32 to vector<8x8xi32>
    %10 = arith.addi %7, %9 : vector<8x8xi32>
    %c0 = arith.constant 0 : index
    %c0_2 = arith.constant 0 : index
    %11 = vector.load %arg5[%c0, %c0_2] : memref<8x8xi8, #tpu.memory_space<vmem>>, vector<8x8xi8>
    %c0_i8 = arith.constant 0 : i8
    %12 = vector.broadcast %c0_i8 : i8 to vector<8x8xi8>
    %13 = arith.cmpi ne, %11, %12 : vector<8x8xi8>
    %14 = arith.cmpi eq, %6, %10 : vector<8x8xi32>
    %15 = arith.ori %13, %14 : vector<8x8xi1>
    %c0_3 = arith.constant 0 : index
    %c0_4 = arith.constant 0 : index
    %16 = vector.load %arg3[%c0_3, %c0_4] : memref<8x6xf32, #tpu.memory_space<vmem>>, vector<8x6xf32>
    %c0_5 = arith.constant 0 : index
    %c0_6 = arith.constant 0 : index
    %17 = vector.load %arg2[%c0_5, %c0_6] : memref<6x8xf32, #tpu.memory_space<vmem>>, vector<6x8xf32>
    %c0_7 = arith.constant 0 : index
    %c0_8 = arith.constant 0 : index
    %18 = vector.load %arg4[%c0_7, %c0_8] : memref<48x8xbf16, #tpu.memory_space<vmem>>, vector<48x8xbf16>
    %19 = vector.extract_strided_slice %16 {offsets = [0, 0], sizes = [8, 1], strides = [1, 1]} : vector<8x6xf32> to vector<8x1xf32>
    %20 = vector.extract_strided_slice %17 {offsets = [0, 0], sizes = [1, 8], strides = [1, 1]} : vector<6x8xf32> to vector<1x8xf32>
    %21 = vector.broadcast %19 : vector<8x1xf32> to vector<8x8xf32>
    %22 = vector.broadcast %20 : vector<1x8xf32> to vector<8x8xf32>
    %23 = arith.addf %21, %22 : vector<8x8xf32>
    %cst = arith.constant 0.000000e+00 : f32
    %24 = vector.broadcast %cst : f32 to vector<8x8xf32>
    %25 = arith.cmpf ogt, %23, %24 : vector<8x8xf32>
    %cst_9 = arith.constant 2.000000e-01 : f32
    %26 = vector.broadcast %cst_9 : f32 to vector<8x8xf32>
    %27 = arith.mulf %26, %23 : vector<8x8xf32>
    %28 = arith.select %25, %23, %27 : vector<8x8xi1>, vector<8x8xf32>
    %cst_10 = arith.constant -1.000000e+30 : f32
    %29 = vector.broadcast %cst_10 : f32 to vector<8x8xf32>
    %30 = arith.select %15, %28, %29 : vector<8x8xi1>, vector<8x8xf32>
    %c0_11 = arith.constant 0 : index
    %c0_12 = arith.constant 0 : index
    %31 = vector.load %arg8[%c0_11, %c0_12] : memref<6x8xf32, #tpu.memory_space<vmem>>, vector<1x8xf32>
    %cst_13 = arith.constant dense<0xFF800000> : vector<8xf32>
    %32 = vector.multi_reduction <maximumf>, %30, %cst_13 [0] : vector<8x8xf32> to vector<8xf32>
    %33 = vector.shape_cast %32 : vector<8xf32> to vector<1x8xf32>
    %34 = arith.maximumf %31, %33 : vector<1x8xf32>
    %35 = arith.subf %31, %34 : vector<1x8xf32>
    %36 = math.exp %35 : vector<1x8xf32>
    %37 = vector.broadcast %34 : vector<1x8xf32> to vector<8x8xf32>
    %38 = arith.subf %30, %37 : vector<8x8xf32>
    %39 = math.exp %38 : vector<8x8xf32>
    %c0_14 = arith.constant 0 : index
    %c0_15 = arith.constant 0 : index
    %40 = vector.load %arg9[%c0_14, %c0_15] : memref<6x8xf32, #tpu.memory_space<vmem>>, vector<1x8xf32>
    %41 = arith.mulf %36, %40 : vector<1x8xf32>
    %cst_16 = arith.constant dense<0.000000e+00> : vector<8xf32>
    %42 = vector.multi_reduction <add>, %39, %cst_16 [0] : vector<8x8xf32> to vector<8xf32>
    %43 = vector.shape_cast %42 : vector<8xf32> to vector<1x8xf32>
    %44 = arith.addf %41, %43 : vector<1x8xf32>
    %c0_17 = arith.constant 0 : index
    %c0_18 = arith.constant 0 : index
    %45 = vector.load %arg9[%c0_17, %c0_18] : memref<6x8xf32, #tpu.memory_space<vmem>>, vector<1x8xf32>
    tpu.vector_store %arg9[%c0_17, %c0_18], %44 {strides = array<i32>} : memref<6x8xf32, #tpu.memory_space<vmem>>, vector<1x8xf32>,
    %46 = vector.extract_strided_slice %18 {offsets = [0, 0], sizes = [8, 8], strides = [1, 1]} : vector<48x8xbf16> to vector<8x8xbf16>
    %47 = arith.truncf %39 : vector<8x8xf32> to vector<8x8xbf16>
    %cst_19 = arith.constant dense<0.000000e+00> : vector<8x8xf32>
    %48 = tpu.matmul %46, %47, %cst_19 {dimension_numbers = #tpu.dot_dimension_numbers<[1], [0], [0], [1], [0, 0, 1, 1], [], []>} : vector<8x8xbf16>, vector<8x8xbf16>, vector<8x8xf32> -> vector<8x8xf32>
    %c0_20 = arith.constant 0 : index
    %c0_21 = arith.constant 0 : index
    %49 = vector.load %arg10[%c0_20, %c0_21] : memref<48x8xf32, #tpu.memory_space<vmem>>, vector<8x8xf32>
    %50 = vector.broadcast %36 : vector<1x8xf32> to vector<8x8xf32>
    %51 = arith.mulf %50, %49 : vector<8x8xf32>
    %52 = arith.addf %51, %48 : vector<8x8xf32>
    %c0_22 = arith.constant 0 : index
    %c0_23 = arith.constant 0 : index
    %53 = vector.load %arg10[%c0_22, %c0_23] : memref<48x8xf32, #tpu.memory_space<vmem>>, vector<8x8xf32>
    tpu.vector_store %arg10[%c0_22, %c0_23], %52 {strides = array<i32>} : memref<48x8xf32, #tpu.memory_space<vmem>>, vector<8x8xf32>,
    %c0_24 = arith.constant 0 : index
    %c0_25 = arith.constant 0 : index
    %54 = vector.load %arg8[%c0_24, %c0_25] : memref<6x8xf32, #tpu.memory_space<vmem>>, vector<1x8xf32>
    tpu.vector_store %arg8[%c0_24, %c0_25], %34 {strides = array<i32>} : memref<6x8xf32, #tpu.memory_space<vmem>>, vector<1x8xf32>,
    %55 = vector.extract_strided_slice %16 {offsets = [0, 1], sizes = [8, 1], strides = [1, 1]} : vector<8x6xf32> to vector<8x1xf32>
    %56 = vector.extract_strided_slice %17 {offsets = [1, 0], sizes = [1, 8], strides = [1, 1]} : vector<6x8xf32> to vector<1x8xf32>
    %57 = vector.broadcast %55 : vector<8x1xf32> to vector<8x8xf32>
    %58 = vector.broadcast %56 : vector<1x8xf32> to vector<8x8xf32>
    %59 = arith.addf %57, %58 : vector<8x8xf32>
    %cst_26 = arith.constant 0.000000e+00 : f32
    %60 = vector.broadcast %cst_26 : f32 to vector<8x8xf32>
    %61 = arith.cmpf ogt, %59, %60 : vector<8x8xf32>
    %cst_27 = arith.constant 2.000000e-01 : f32
    %62 = vector.broadcast %cst_27 : f32 to vector<8x8xf32>
    %63 = arith.mulf %62, %59 : vector<8x8xf32>
    %64 = arith.select %61, %59, %63 : vector<8x8xi1>, vector<8x8xf32>
    %cst_28 = arith.constant -1.000000e+30 : f32
    %65 = vector.broadcast %cst_28 : f32 to vector<8x8xf32>
    %66 = arith.select %15, %64, %65 : vector<8x8xi1>, vector<8x8xf32>
    %c1 = arith.constant 1 : index
    %c0_29 = arith.constant 0 : index
    %67 = vector.load %arg8[%c1, %c0_29] : memref<6x8xf32, #tpu.memory_space<vmem>>, vector<1x8xf32>
    %cst_30 = arith.constant dense<0xFF800000> : vector<8xf32>
    %68 = vector.multi_reduction <maximumf>, %66, %cst_30 [0] : vector<8x8xf32> to vector<8xf32>
    %69 = vector.shape_cast %68 : vector<8xf32> to vector<1x8xf32>
    %70 = arith.maximumf %67, %69 : vector<1x8xf32>
    %71 = arith.subf %67, %70 : vector<1x8xf32>
    %72 = math.exp %71 : vector<1x8xf32>
    %73 = vector.broadcast %70 : vector<1x8xf32> to vector<8x8xf32>
    %74 = arith.subf %66, %73 : vector<8x8xf32>
    %75 = math.exp %74 : vector<8x8xf32>
    %c1_31 = arith.constant 1 : index
    %c0_32 = arith.constant 0 : index
    %76 = vector.load %arg9[%c1_31, %c0_32] : memref<6x8xf32, #tpu.memory_space<vmem>>, vector<1x8xf32>
    %77 = arith.mulf %72, %76 : vector<1x8xf32>
    %cst_33 = arith.constant dense<0.000000e+00> : vector<8xf32>
    %78 = vector.multi_reduction <add>, %75, %cst_33 [0] : vector<8x8xf32> to vector<8xf32>
    %79 = vector.shape_cast %78 : vector<8xf32> to vector<1x8xf32>
    %80 = arith.addf %77, %79 : vector<1x8xf32>
    %c1_34 = arith.constant 1 : index
    %c0_35 = arith.constant 0 : index
    %81 = vector.load %arg9[%c1_34, %c0_35] : memref<6x8xf32, #tpu.memory_space<vmem>>, vector<1x8xf32>
    tpu.vector_store %arg9[%c1_34, %c0_35], %80 {strides = array<i32>} : memref<6x8xf32, #tpu.memory_space<vmem>>, vector<1x8xf32>,
    %82 = vector.extract_strided_slice %18 {offsets = [8, 0], sizes = [8, 8], strides = [1, 1]} : vector<48x8xbf16> to vector<8x8xbf16>
    %83 = arith.truncf %75 : vector<8x8xf32> to vector<8x8xbf16>
    %cst_36 = arith.constant dense<0.000000e+00> : vector<8x8xf32>
    %84 = tpu.matmul %82, %83, %cst_36 {dimension_numbers = #tpu.dot_dimension_numbers<[1], [0], [0], [1], [0, 0, 1, 1], [], []>} : vector<8x8xbf16>, vector<8x8xbf16>, vector<8x8xf32> -> vector<8x8xf32>
    %c8 = arith.constant 8 : index
    %c0_37 = arith.constant 0 : index
    %85 = vector.load %arg10[%c8, %c0_37] : memref<48x8xf32, #tpu.memory_space<vmem>>, vector<8x8xf32>
    %86 = vector.broadcast %72 : vector<1x8xf32> to vector<8x8xf32>
    %87 = arith.mulf %86, %85 : vector<8x8xf32>
    %88 = arith.addf %87, %84 : vector<8x8xf32>
    %c8_38 = arith.constant 8 : index
    %c0_39 = arith.constant 0 : index
    %89 = vector.load %arg10[%c8_38, %c0_39] : memref<48x8xf32, #tpu.memory_space<vmem>>, vector<8x8xf32>
    tpu.vector_store %arg10[%c8_38, %c0_39], %88 {strides = array<i32>} : memref<48x8xf32, #tpu.memory_space<vmem>>, vector<8x8xf32>,
    %c1_40 = arith.constant 1 : index
    %c0_41 = arith.constant 0 : index
    %90 = vector.load %arg8[%c1_40, %c0_41] : memref<6x8xf32, #tpu.memory_space<vmem>>, vector<1x8xf32>
    tpu.vector_store %arg8[%c1_40, %c0_41], %70 {strides = array<i32>} : memref<6x8xf32, #tpu.memory_space<vmem>>, vector<1x8xf32>,
    %91 = vector.extract_strided_slice %16 {offsets = [0, 2], sizes = [8, 1], strides = [1, 1]} : vector<8x6xf32> to vector<8x1xf32>
    %92 = vector.extract_strided_slice %17 {offsets = [2, 0], sizes = [1, 8], strides = [1, 1]} : vector<6x8xf32> to vector<1x8xf32>
    %93 = vector.broadcast %91 : vector<8x1xf32> to vector<8x8xf32>
    %94 = vector.broadcast %92 : vector<1x8xf32> to vector<8x8xf32>
    %95 = arith.addf %93, %94 : vector<8x8xf32>
    %cst_42 = arith.constant 0.000000e+00 : f32
    %96 = vector.broadcast %cst_42 : f32 to vector<8x8xf32>
    %97 = arith.cmpf ogt, %95, %96 : vector<8x8xf32>
    %cst_43 = arith.constant 2.000000e-01 : f32
    %98 = vector.broadcast %cst_43 : f32 to vector<8x8xf32>
    %99 = arith.mulf %98, %95 : vector<8x8xf32>
    %100 = arith.select %97, %95, %99 : vector<8x8xi1>, vector<8x8xf32>
    %cst_44 = arith.constant -1.000000e+30 : f32
    %101 = vector.broadcast %cst_44 : f32 to vector<8x8xf32>
    %102 = arith.select %15, %100, %101 : vector<8x8xi1>, vector<8x8xf32>
    %c2 = arith.constant 2 : index
    %c0_45 = arith.constant 0 : index
    %103 = vector.load %arg8[%c2, %c0_45] : memref<6x8xf32, #tpu.memory_space<vmem>>, vector<1x8xf32>
    %cst_46 = arith.constant dense<0xFF800000> : vector<8xf32>
    %104 = vector.multi_reduction <maximumf>, %102, %cst_46 [0] : vector<8x8xf32> to vector<8xf32>
    %105 = vector.shape_cast %104 : vector<8xf32> to vector<1x8xf32>
    %106 = arith.maximumf %103, %105 : vector<1x8xf32>
    %107 = arith.subf %103, %106 : vector<1x8xf32>
    %108 = math.exp %107 : vector<1x8xf32>
    %109 = vector.broadcast %106 : vector<1x8xf32> to vector<8x8xf32>
    %110 = arith.subf %102, %109 : vector<8x8xf32>
    %111 = math.exp %110 : vector<8x8xf32>
    %c2_47 = arith.constant 2 : index
    %c0_48 = arith.constant 0 : index
    %112 = vector.load %arg9[%c2_47, %c0_48] : memref<6x8xf32, #tpu.memory_space<vmem>>, vector<1x8xf32>
    %113 = arith.mulf %108, %112 : vector<1x8xf32>
    %cst_49 = arith.constant dense<0.000000e+00> : vector<8xf32>
    %114 = vector.multi_reduction <add>, %111, %cst_49 [0] : vector<8x8xf32> to vector<8xf32>
    %115 = vector.shape_cast %114 : vector<8xf32> to vector<1x8xf32>
    %116 = arith.addf %113, %115 : vector<1x8xf32>
    %c2_50 = arith.constant 2 : index
    %c0_51 = arith.constant 0 : index
    %117 = vector.load %arg9[%c2_50, %c0_51] : memref<6x8xf32, #tpu.memory_space<vmem>>, vector<1x8xf32>
    tpu.vector_store %arg9[%c2_50, %c0_51], %116 {strides = array<i32>} : memref<6x8xf32, #tpu.memory_space<vmem>>, vector<1x8xf32>,
    %118 = vector.extract_strided_slice %18 {offsets = [16, 0], sizes = [8, 8], strides = [1, 1]} : vector<48x8xbf16> to vector<8x8xbf16>
    %119 = arith.truncf %111 : vector<8x8xf32> to vector<8x8xbf16>
    %cst_52 = arith.constant dense<0.000000e+00> : vector<8x8xf32>
    %120 = tpu.matmul %118, %119, %cst_52 {dimension_numbers = #tpu.dot_dimension_numbers<[1], [0], [0], [1], [0, 0, 1, 1], [], []>} : vector<8x8xbf16>, vector<8x8xbf16>, vector<8x8xf32> -> vector<8x8xf32>
    %c16 = arith.constant 16 : index
    %c0_53 = arith.constant 0 : index
    %121 = vector.load %arg10[%c16, %c0_53] : memref<48x8xf32, #tpu.memory_space<vmem>>, vector<8x8xf32>
    %122 = vector.broadcast %108 : vector<1x8xf32> to vector<8x8xf32>
    %123 = arith.mulf %122, %121 : vector<8x8xf32>
    %124 = arith.addf %123, %120 : vector<8x8xf32>
    %c16_54 = arith.constant 16 : index
    %c0_55 = arith.constant 0 : index
    %125 = vector.load %arg10[%c16_54, %c0_55] : memref<48x8xf32, #tpu.memory_space<vmem>>, vector<8x8xf32>
    tpu.vector_store %arg10[%c16_54, %c0_55], %124 {strides = array<i32>} : memref<48x8xf32, #tpu.memory_space<vmem>>, vector<8x8xf32>,
    %c2_56 = arith.constant 2 : index
    %c0_57 = arith.constant 0 : index
    %126 = vector.load %arg8[%c2_56, %c0_57] : memref<6x8xf32, #tpu.memory_space<vmem>>, vector<1x8xf32>
    tpu.vector_store %arg8[%c2_56, %c0_57], %106 {strides = array<i32>} : memref<6x8xf32, #tpu.memory_space<vmem>>, vector<1x8xf32>,
    %127 = vector.extract_strided_slice %16 {offsets = [0, 3], sizes = [8, 1], strides = [1, 1]} : vector<8x6xf32> to vector<8x1xf32>
    %128 = vector.extract_strided_slice %17 {offsets = [3, 0], sizes = [1, 8], strides = [1, 1]} : vector<6x8xf32> to vector<1x8xf32>
    %129 = vector.broadcast %127 : vector<8x1xf32> to vector<8x8xf32>
    %130 = vector.broadcast %128 : vector<1x8xf32> to vector<8x8xf32>
    %131 = arith.addf %129, %130 : vector<8x8xf32>
    %cst_58 = arith.constant 0.000000e+00 : f32
    %132 = vector.broadcast %cst_58 : f32 to vector<8x8xf32>
    %133 = arith.cmpf ogt, %131, %132 : vector<8x8xf32>
    %cst_59 = arith.constant 2.000000e-01 : f32
    %134 = vector.broadcast %cst_59 : f32 to vector<8x8xf32>
    %135 = arith.mulf %134, %131 : vector<8x8xf32>
    %136 = arith.select %133, %131, %135 : vector<8x8xi1>, vector<8x8xf32>
    %cst_60 = arith.constant -1.000000e+30 : f32
    %137 = vector.broadcast %cst_60 : f32 to vector<8x8xf32>
    %138 = arith.select %15, %136, %137 : vector<8x8xi1>, vector<8x8xf32>
    %c3 = arith.constant 3 : index
    %c0_61 = arith.constant 0 : index
    %139 = vector.load %arg8[%c3, %c0_61] : memref<6x8xf32, #tpu.memory_space<vmem>>, vector<1x8xf32>
    %cst_62 = arith.constant dense<0xFF800000> : vector<8xf32>
    %140 = vector.multi_reduction <maximumf>, %138, %cst_62 [0] : vector<8x8xf32> to vector<8xf32>
    %141 = vector.shape_cast %140 : vector<8xf32> to vector<1x8xf32>
    %142 = arith.maximumf %139, %141 : vector<1x8xf32>
    %143 = arith.subf %139, %142 : vector<1x8xf32>
    %144 = math.exp %143 : vector<1x8xf32>
    %145 = vector.broadcast %142 : vector<1x8xf32> to vector<8x8xf32>
    %146 = arith.subf %138, %145 : vector<8x8xf32>
    %147 = math.exp %146 : vector<8x8xf32>
    %c3_63 = arith.constant 3 : index
    %c0_64 = arith.constant 0 : index
    %148 = vector.load %arg9[%c3_63, %c0_64] : memref<6x8xf32, #tpu.memory_space<vmem>>, vector<1x8xf32>
    %149 = arith.mulf %144, %148 : vector<1x8xf32>
    %cst_65 = arith.constant dense<0.000000e+00> : vector<8xf32>
    %150 = vector.multi_reduction <add>, %147, %cst_65 [0] : vector<8x8xf32> to vector<8xf32>
    %151 = vector.shape_cast %150 : vector<8xf32> to vector<1x8xf32>
    %152 = arith.addf %149, %151 : vector<1x8xf32>
    %c3_66 = arith.constant 3 : index
    %c0_67 = arith.constant 0 : index
    %153 = vector.load %arg9[%c3_66, %c0_67] : memref<6x8xf32, #tpu.memory_space<vmem>>, vector<1x8xf32>
    tpu.vector_store %arg9[%c3_66, %c0_67], %152 {strides = array<i32>} : memref<6x8xf32, #tpu.memory_space<vmem>>, vector<1x8xf32>,
    %154 = vector.extract_strided_slice %18 {offsets = [24, 0], sizes = [8, 8], strides = [1, 1]} : vector<48x8xbf16> to vector<8x8xbf16>
    %155 = arith.truncf %147 : vector<8x8xf32> to vector<8x8xbf16>
    %cst_68 = arith.constant dense<0.000000e+00> : vector<8x8xf32>
    %156 = tpu.matmul %154, %155, %cst_68 {dimension_numbers = #tpu.dot_dimension_numbers<[1], [0], [0], [1], [0, 0, 1, 1], [], []>} : vector<8x8xbf16>, vector<8x8xbf16>, vector<8x8xf32> -> vector<8x8xf32>
    %c24 = arith.constant 24 : index
    %c0_69 = arith.constant 0 : index
    %157 = vector.load %arg10[%c24, %c0_69] : memref<48x8xf32, #tpu.memory_space<vmem>>, vector<8x8xf32>
    %158 = vector.broadcast %144 : vector<1x8xf32> to vector<8x8xf32>
    %159 = arith.mulf %158, %157 : vector<8x8xf32>
    %160 = arith.addf %159, %156 : vector<8x8xf32>
    %c24_70 = arith.constant 24 : index
    %c0_71 = arith.constant 0 : index
    %161 = vector.load %arg10[%c24_70, %c0_71] : memref<48x8xf32, #tpu.memory_space<vmem>>, vector<8x8xf32>
    tpu.vector_store %arg10[%c24_70, %c0_71], %160 {strides = array<i32>} : memref<48x8xf32, #tpu.memory_space<vmem>>, vector<8x8xf32>,
    %c3_72 = arith.constant 3 : index
    %c0_73 = arith.constant 0 : index
    %162 = vector.load %arg8[%c3_72, %c0_73] : memref<6x8xf32, #tpu.memory_space<vmem>>, vector<1x8xf32>
    tpu.vector_store %arg8[%c3_72, %c0_73], %142 {strides = array<i32>} : memref<6x8xf32, #tpu.memory_space<vmem>>, vector<1x8xf32>,
    %163 = vector.extract_strided_slice %16 {offsets = [0, 4], sizes = [8, 1], strides = [1, 1]} : vector<8x6xf32> to vector<8x1xf32>
    %164 = vector.extract_strided_slice %17 {offsets = [4, 0], sizes = [1, 8], strides = [1, 1]} : vector<6x8xf32> to vector<1x8xf32>
    %165 = vector.broadcast %163 : vector<8x1xf32> to vector<8x8xf32>
    %166 = vector.broadcast %164 : vector<1x8xf32> to vector<8x8xf32>
    %167 = arith.addf %165, %166 : vector<8x8xf32>
    %cst_74 = arith.constant 0.000000e+00 : f32
    %168 = vector.broadcast %cst_74 : f32 to vector<8x8xf32>
    %169 = arith.cmpf ogt, %167, %168 : vector<8x8xf32>
    %cst_75 = arith.constant 2.000000e-01 : f32
    %170 = vector.broadcast %cst_75 : f32 to vector<8x8xf32>
    %171 = arith.mulf %170, %167 : vector<8x8xf32>
    %172 = arith.select %169, %167, %171 : vector<8x8xi1>, vector<8x8xf32>
    %cst_76 = arith.constant -1.000000e+30 : f32
    %173 = vector.broadcast %cst_76 : f32 to vector<8x8xf32>
    %174 = arith.select %15, %172, %173 : vector<8x8xi1>, vector<8x8xf32>
    %c4 = arith.constant 4 : index
    %c0_77 = arith.constant 0 : index
    %175 = vector.load %arg8[%c4, %c0_77] : memref<6x8xf32, #tpu.memory_space<vmem>>, vector<1x8xf32>
    %cst_78 = arith.constant dense<0xFF800000> : vector<8xf32>
    %176 = vector.multi_reduction <maximumf>, %174, %cst_78 [0] : vector<8x8xf32> to vector<8xf32>
    %177 = vector.shape_cast %176 : vector<8xf32> to vector<1x8xf32>
    %178 = arith.maximumf %175, %177 : vector<1x8xf32>
    %179 = arith.subf %175, %178 : vector<1x8xf32>
    %180 = math.exp %179 : vector<1x8xf32>
    %181 = vector.broadcast %178 : vector<1x8xf32> to vector<8x8xf32>
    %182 = arith.subf %174, %181 : vector<8x8xf32>
    %183 = math.exp %182 : vector<8x8xf32>
    %c4_79 = arith.constant 4 : index
    %c0_80 = arith.constant 0 : index
    %184 = vector.load %arg9[%c4_79, %c0_80] : memref<6x8xf32, #tpu.memory_space<vmem>>, vector<1x8xf32>
    %185 = arith.mulf %180, %184 : vector<1x8xf32>
    %cst_81 = arith.constant dense<0.000000e+00> : vector<8xf32>
    %186 = vector.multi_reduction <add>, %183, %cst_81 [0] : vector<8x8xf32> to vector<8xf32>
    %187 = vector.shape_cast %186 : vector<8xf32> to vector<1x8xf32>
    %188 = arith.addf %185, %187 : vector<1x8xf32>
    %c4_82 = arith.constant 4 : index
    %c0_83 = arith.constant 0 : index
    %189 = vector.load %arg9[%c4_82, %c0_83] : memref<6x8xf32, #tpu.memory_space<vmem>>, vector<1x8xf32>
    tpu.vector_store %arg9[%c4_82, %c0_83], %188 {strides = array<i32>} : memref<6x8xf32, #tpu.memory_space<vmem>>, vector<1x8xf32>,
    %190 = vector.extract_strided_slice %18 {offsets = [32, 0], sizes = [8, 8], strides = [1, 1]} : vector<48x8xbf16> to vector<8x8xbf16>
    %191 = arith.truncf %183 : vector<8x8xf32> to vector<8x8xbf16>
    %cst_84 = arith.constant dense<0.000000e+00> : vector<8x8xf32>
    %192 = tpu.matmul %190, %191, %cst_84 {dimension_numbers = #tpu.dot_dimension_numbers<[1], [0], [0], [1], [0, 0, 1, 1], [], []>} : vector<8x8xbf16>, vector<8x8xbf16>, vector<8x8xf32> -> vector<8x8xf32>
    %c32 = arith.constant 32 : index
    %c0_85 = arith.constant 0 : index
    %193 = vector.load %arg10[%c32, %c0_85] : memref<48x8xf32, #tpu.memory_space<vmem>>, vector<8x8xf32>
    %194 = vector.broadcast %180 : vector<1x8xf32> to vector<8x8xf32>
    %195 = arith.mulf %194, %193 : vector<8x8xf32>
    %196 = arith.addf %195, %192 : vector<8x8xf32>
    %c32_86 = arith.constant 32 : index
    %c0_87 = arith.constant 0 : index
    %197 = vector.load %arg10[%c32_86, %c0_87] : memref<48x8xf32, #tpu.memory_space<vmem>>, vector<8x8xf32>
    tpu.vector_store %arg10[%c32_86, %c0_87], %196 {strides = array<i32>} : memref<48x8xf32, #tpu.memory_space<vmem>>, vector<8x8xf32>,
    %c4_88 = arith.constant 4 : index
    %c0_89 = arith.constant 0 : index
    %198 = vector.load %arg8[%c4_88, %c0_89] : memref<6x8xf32, #tpu.memory_space<vmem>>, vector<1x8xf32>
    tpu.vector_store %arg8[%c4_88, %c0_89], %178 {strides = array<i32>} : memref<6x8xf32, #tpu.memory_space<vmem>>, vector<1x8xf32>,
    %199 = vector.extract_strided_slice %16 {offsets = [0, 5], sizes = [8, 1], strides = [1, 1]} : vector<8x6xf32> to vector<8x1xf32>
    %200 = vector.extract_strided_slice %17 {offsets = [5, 0], sizes = [1, 8], strides = [1, 1]} : vector<6x8xf32> to vector<1x8xf32>
    %201 = vector.broadcast %199 : vector<8x1xf32> to vector<8x8xf32>
    %202 = vector.broadcast %200 : vector<1x8xf32> to vector<8x8xf32>
    %203 = arith.addf %201, %202 : vector<8x8xf32>
    %cst_90 = arith.constant 0.000000e+00 : f32
    %204 = vector.broadcast %cst_90 : f32 to vector<8x8xf32>
    %205 = arith.cmpf ogt, %203, %204 : vector<8x8xf32>
    %cst_91 = arith.constant 2.000000e-01 : f32
    %206 = vector.broadcast %cst_91 : f32 to vector<8x8xf32>
    %207 = arith.mulf %206, %203 : vector<8x8xf32>
    %208 = arith.select %205, %203, %207 : vector<8x8xi1>, vector<8x8xf32>
    %cst_92 = arith.constant -1.000000e+30 : f32
    %209 = vector.broadcast %cst_92 : f32 to vector<8x8xf32>
    %210 = arith.select %15, %208, %209 : vector<8x8xi1>, vector<8x8xf32>
    %c5 = arith.constant 5 : index
    %c0_93 = arith.constant 0 : index
    %211 = vector.load %arg8[%c5, %c0_93] : memref<6x8xf32, #tpu.memory_space<vmem>>, vector<1x8xf32>
    %cst_94 = arith.constant dense<0xFF800000> : vector<8xf32>
    %212 = vector.multi_reduction <maximumf>, %210, %cst_94 [0] : vector<8x8xf32> to vector<8xf32>
    %213 = vector.shape_cast %212 : vector<8xf32> to vector<1x8xf32>
    %214 = arith.maximumf %211, %213 : vector<1x8xf32>
    %215 = arith.subf %211, %214 : vector<1x8xf32>
    %216 = math.exp %215 : vector<1x8xf32>
    %217 = vector.broadcast %214 : vector<1x8xf32> to vector<8x8xf32>
    %218 = arith.subf %210, %217 : vector<8x8xf32>
    %219 = math.exp %218 : vector<8x8xf32>
    %c5_95 = arith.constant 5 : index
    %c0_96 = arith.constant 0 : index
    %220 = vector.load %arg9[%c5_95, %c0_96] : memref<6x8xf32, #tpu.memory_space<vmem>>, vector<1x8xf32>
    %221 = arith.mulf %216, %220 : vector<1x8xf32>
    %cst_97 = arith.constant dense<0.000000e+00> : vector<8xf32>
    %222 = vector.multi_reduction <add>, %219, %cst_97 [0] : vector<8x8xf32> to vector<8xf32>
    %223 = vector.shape_cast %222 : vector<8xf32> to vector<1x8xf32>
    %224 = arith.addf %221, %223 : vector<1x8xf32>
    %c5_98 = arith.constant 5 : index
    %c0_99 = arith.constant 0 : index
    %225 = vector.load %arg9[%c5_98, %c0_99] : memref<6x8xf32, #tpu.memory_space<vmem>>, vector<1x8xf32>
    tpu.vector_store %arg9[%c5_98, %c0_99], %224 {strides = array<i32>} : memref<6x8xf32, #tpu.memory_space<vmem>>, vector<1x8xf32>,
    %226 = vector.extract_strided_slice %18 {offsets = [40, 0], sizes = [8, 8], strides = [1, 1]} : vector<48x8xbf16> to vector<8x8xbf16>
    %227 = arith.truncf %219 : vector<8x8xf32> to vector<8x8xbf16>
    %cst_100 = arith.constant dense<0.000000e+00> : vector<8x8xf32>
    %228 = tpu.matmul %226, %227, %cst_100 {dimension_numbers = #tpu.dot_dimension_numbers<[1], [0], [0], [1], [0, 0, 1, 1], [], []>} : vector<8x8xbf16>, vector<8x8xbf16>, vector<8x8xf32> -> vector<8x8xf32>
    %c40 = arith.constant 40 : index
    %c0_101 = arith.constant 0 : index
    %229 = vector.load %arg10[%c40, %c0_101] : memref<48x8xf32, #tpu.memory_space<vmem>>, vector<8x8xf32>
    %230 = vector.broadcast %216 : vector<1x8xf32> to vector<8x8xf32>
    %231 = arith.mulf %230, %229 : vector<8x8xf32>
    %232 = arith.addf %231, %228 : vector<8x8xf32>
    %c40_102 = arith.constant 40 : index
    %c0_103 = arith.constant 0 : index
    %233 = vector.load %arg10[%c40_102, %c0_103] : memref<48x8xf32, #tpu.memory_space<vmem>>, vector<8x8xf32>
    tpu.vector_store %arg10[%c40_102, %c0_103], %232 {strides = array<i32>} : memref<48x8xf32, #tpu.memory_space<vmem>>, vector<8x8xf32>,
    %c5_104 = arith.constant 5 : index
    %c0_105 = arith.constant 0 : index
    %234 = vector.load %arg8[%c5_104, %c0_105] : memref<6x8xf32, #tpu.memory_space<vmem>>, vector<1x8xf32>
    tpu.vector_store %arg8[%c5_104, %c0_105], %214 {strides = array<i32>} : memref<6x8xf32, #tpu.memory_space<vmem>>, vector<1x8xf32>,
    %c0_i32_106 = arith.constant 0 : i32
    %235 = arith.cmpi eq, %arg1, %c0_i32_106 : i32
    %236 = arith.extui %235 : i1 to i32
    %c0_i32_107 = arith.constant 0 : i32
    %237 = arith.cmpi ne, %236, %c0_i32_107 : i32
    scf.if %237 {
      %c0_108 = arith.constant 0 : index
      %c0_109 = arith.constant 0 : index
      %238 = vector.load %arg9[%c0_108, %c0_109] : memref<6x8xf32, #tpu.memory_space<vmem>>, vector<6x8xf32>
      %cst_110 = arith.constant 1.000000e+00 : f32
      %239 = vector.broadcast %cst_110 : f32 to vector<6x8xf32>
      %240 = arith.divf %239, %238 : vector<6x8xf32>
      %c0_111 = arith.constant 0 : index
      %c0_112 = arith.constant 0 : index
      %241 = vector.load %arg6[%c0_111, %c0_112] : memref<16x1xf32, #tpu.memory_space<vmem>>, vector<16x1xf32>
      %cst_113 = arith.constant 0.000000e+00 : f32
      %242 = vector.broadcast %cst_113 : f32 to vector<8x8xf32>
      %c0_114 = arith.constant 0 : index
      %c0_115 = arith.constant 0 : index
      %243 = vector.load %arg10[%c0_114, %c0_115] : memref<48x8xf32, #tpu.memory_space<vmem>>, vector<8x8xf32>
      %244 = vector.extract_strided_slice %240 {offsets = [0, 0], sizes = [1, 8], strides = [1, 1]} : vector<6x8xf32> to vector<1x8xf32>
      %245 = vector.broadcast %244 : vector<1x8xf32> to vector<8x8xf32>
      %246 = arith.mulf %243, %245 : vector<8x8xf32>
      %247 = arith.addf %242, %246 : vector<8x8xf32>
      %c8_116 = arith.constant 8 : index
      %c0_117 = arith.constant 0 : index
      %248 = vector.load %arg10[%c8_116, %c0_117] : memref<48x8xf32, #tpu.memory_space<vmem>>, vector<8x8xf32>
      %249 = vector.extract_strided_slice %240 {offsets = [1, 0], sizes = [1, 8], strides = [1, 1]} : vector<6x8xf32> to vector<1x8xf32>
      %250 = vector.broadcast %249 : vector<1x8xf32> to vector<8x8xf32>
      %251 = arith.mulf %248, %250 : vector<8x8xf32>
      %252 = arith.addf %247, %251 : vector<8x8xf32>
      %c16_118 = arith.constant 16 : index
      %c0_119 = arith.constant 0 : index
      %253 = vector.load %arg10[%c16_118, %c0_119] : memref<48x8xf32, #tpu.memory_space<vmem>>, vector<8x8xf32>
      %254 = vector.extract_strided_slice %240 {offsets = [2, 0], sizes = [1, 8], strides = [1, 1]} : vector<6x8xf32> to vector<1x8xf32>
      %255 = vector.broadcast %254 : vector<1x8xf32> to vector<8x8xf32>
      %256 = arith.mulf %253, %255 : vector<8x8xf32>
      %257 = arith.addf %252, %256 : vector<8x8xf32>
      %cst_120 = arith.constant 0.333333343 : f32
      %258 = vector.broadcast %cst_120 : f32 to vector<8x8xf32>
      %259 = arith.mulf %257, %258 : vector<8x8xf32>
      %260 = vector.extract_strided_slice %241 {offsets = [0, 0], sizes = [8, 1], strides = [1, 1]} : vector<16x1xf32> to vector<8x1xf32>
      %261 = vector.broadcast %260 : vector<8x1xf32> to vector<8x8xf32>
      %262 = arith.addf %259, %261 : vector<8x8xf32>
      %c0_121 = arith.constant 0 : index
      %c0_122 = arith.constant 0 : index
      %263 = vector.load %arg7[%c0_121, %c0_122] : memref<16x8xf32, #tpu.memory_space<vmem>>, vector<8x8xf32>
      tpu.vector_store %arg7[%c0_121, %c0_122], %262 {strides = array<i32>} : memref<16x8xf32, #tpu.memory_space<vmem>>, vector<8x8xf32>,
      %cst_123 = arith.constant 0.000000e+00 : f32
      %264 = vector.broadcast %cst_123 : f32 to vector<8x8xf32>
      %c24_124 = arith.constant 24 : index
      %c0_125 = arith.constant 0 : index
      %265 = vector.load %arg10[%c24_124, %c0_125] : memref<48x8xf32, #tpu.memory_space<vmem>>, vector<8x8xf32>
      %266 = vector.extract_strided_slice %240 {offsets = [3, 0], sizes = [1, 8], strides = [1, 1]} : vector<6x8xf32> to vector<1x8xf32>
      %267 = vector.broadcast %266 : vector<1x8xf32> to vector<8x8xf32>
      %268 = arith.mulf %265, %267 : vector<8x8xf32>
      %269 = arith.addf %264, %268 : vector<8x8xf32>
      %c32_126 = arith.constant 32 : index
      %c0_127 = arith.constant 0 : index
      %270 = vector.load %arg10[%c32_126, %c0_127] : memref<48x8xf32, #tpu.memory_space<vmem>>, vector<8x8xf32>
      %271 = vector.extract_strided_slice %240 {offsets = [4, 0], sizes = [1, 8], strides = [1, 1]} : vector<6x8xf32> to vector<1x8xf32>
      %272 = vector.broadcast %271 : vector<1x8xf32> to vector<8x8xf32>
      %273 = arith.mulf %270, %272 : vector<8x8xf32>
      %274 = arith.addf %269, %273 : vector<8x8xf32>
      %c40_128 = arith.constant 40 : index
      %c0_129 = arith.constant 0 : index
      %275 = vector.load %arg10[%c40_128, %c0_129] : memref<48x8xf32, #tpu.memory_space<vmem>>, vector<8x8xf32>
      %276 = vector.extract_strided_slice %240 {offsets = [5, 0], sizes = [1, 8], strides = [1, 1]} : vector<6x8xf32> to vector<1x8xf32>
      %277 = vector.broadcast %276 : vector<1x8xf32> to vector<8x8xf32>
      %278 = arith.mulf %275, %277 : vector<8x8xf32>
      %279 = arith.addf %274, %278 : vector<8x8xf32>
      %cst_130 = arith.constant 0.333333343 : f32
      %280 = vector.broadcast %cst_130 : f32 to vector<8x8xf32>
      %281 = arith.mulf %279, %280 : vector<8x8xf32>
      %282 = vector.extract_strided_slice %241 {offsets = [8, 0], sizes = [8, 1], strides = [1, 1]} : vector<16x1xf32> to vector<8x1xf32>
      %283 = vector.broadcast %282 : vector<8x1xf32> to vector<8x8xf32>
      %284 = arith.addf %281, %283 : vector<8x8xf32>
      %c8_131 = arith.constant 8 : index
      %c0_132 = arith.constant 0 : index
      %285 = vector.load %arg7[%c8_131, %c0_132] : memref<16x8xf32, #tpu.memory_space<vmem>>, vector<8x8xf32>
      tpu.vector_store %arg7[%c8_131, %c0_132], %284 {strides = array<i32>} : memref<16x8xf32, #tpu.memory_space<vmem>>, vector<8x8xf32>,
    } else {
    }
    return
  }
  func.func @transform_0(%arg0: i32, %arg1: i32) -> (i32, i32) {
    %c0_i32 = arith.constant 0 : i32
    %c0_i32_0 = arith.constant 0 : i32
    return %c0_i32, %arg0 : i32, i32
  }
  func.func @transform_1(%arg0: i32, %arg1: i32) -> (i32, i32) {
    %c0_i32 = arith.constant 0 : i32
    %c0_i32_0 = arith.constant 0 : i32
    return %arg1, %c0_i32 : i32, i32
  }
  func.func @transform_2(%arg0: i32, %arg1: i32) -> (i32, i32) {
    %c0_i32 = arith.constant 0 : i32
    %c0_i32_0 = arith.constant 0 : i32
    return %c0_i32, %arg1 : i32, i32
  }
  func.func @transform_3(%arg0: i32, %arg1: i32) -> (i32, i32) {
    %c0_i32 = arith.constant 0 : i32
    return %arg1, %arg0 : i32, i32
  }
  func.func @transform_4(%arg0: i32, %arg1: i32) -> (i32, i32) {
    %c0_i32 = arith.constant 0 : i32
    %c0_i32_0 = arith.constant 0 : i32
    %c0_i32_1 = arith.constant 0 : i32
    return %c0_i32, %c0_i32_0 : i32, i32
  }
  func.func @transform_5(%arg0: i32, %arg1: i32) -> (i32, i32) {
    %c0_i32 = arith.constant 0 : i32
    %c0_i32_0 = arith.constant 0 : i32
    return %c0_i32, %arg0 : i32, i32
  }
}

</mosaic_0001>

<llo_original>
// kernel: hidden_gat_encoder.3
$region0: #{hidden_gat_encoder.3}
  #allocation0 [shape = 'u32[]', space=smem, size = 0x4, offset = 0x4, fixed_abs, tag = 'smem constant byte address 0x4 - core index']
  #allocation1 [shape = 'u32[144,128]{1,0:T(1,128)}', space=vmem, size = 0x12000, scoped, tag = 'internal scratch']
  #allocation2 [shape = 'f32[6,8]{1,0:T(8,128)}', space=vmem, size = 0x1000, scoped, tag = 'scratch operand']
  #allocation3 [shape = 'f32[6,8]{1,0:T(8,128)}', space=vmem, size = 0x1000, scoped, tag = 'scratch operand']
  #allocation4 [shape = 'f32[48,8]{1,0:T(8,128)}', space=vmem, size = 0x6000, scoped, tag = 'scratch operand']
  %s0 = inlined_call_operand.vmem [shape: f32[6,8], index: 0, kind: input, shape index: {}]
  %s1 = inlined_call_operand.vmem [shape: f32[8,6], index: 1, kind: input, shape index: {}]
  %s2 = inlined_call_operand.vmem [shape: bf16[48,8], index: 2, kind: input, shape index: {}]
  %s3 = inlined_call_operand.vmem [shape: s8[8,8], index: 3, kind: input, shape index: {}]
  %s4 = inlined_call_operand.vmem [shape: f32[16,1], index: 4, kind: input, shape index: {}]
  %s5 = inlined_call_operand.vmem [shape: f32[16,8], index: 5, kind: output, shape index: {}]
  %s6 = sld [smem:[#allocation0]]
  $region38: #{hidden_gat_encoder.3} parent=0
    _
  %s8 = ssub.s32 1, %s6
  %s9 = scalar_select 0, %s8, %s6
  // Predicated region
  $region2: #{hidden_gat_encoder.3} parent=0 // pred_check
    _
  $region3: #{hidden_gat_encoder.3} parent=0 // pred_check_branch
    %11 = sbr.rel (0) target = $region5
  $region4: #{hidden_gat_encoder.3} parent=0 // pred_region
    _
  $region5: #{hidden_gat_encoder.3} parent=0 // pred_fallthru
    _
  // Predicated region
  $region6: #{hidden_gat_encoder.3} parent=0 // pred_check
    _
  $region7: #{hidden_gat_encoder.3} parent=0 // pred_check_branch
    %13 = sbr.rel (0) target = $region9
  $region8: #{hidden_gat_encoder.3} parent=0 // pred_region
    _
  $region9: #{hidden_gat_encoder.3} parent=0 // pred_fallthru
    _
  // Predicated region
  $region10: #{hidden_gat_encoder.3} parent=0 // pred_check
    _
  $region11: #{hidden_gat_encoder.3} parent=0 // pred_check_branch
    %15 = sbr.rel (0) target = $region13
  $region12: #{hidden_gat_encoder.3} parent=0 // pred_region
    _
  $region13: #{hidden_gat_encoder.3} parent=0 // pred_fallthru
    _
  // Predicated region
  $region14: #{hidden_gat_encoder.3} parent=0 // pred_check
    _
  $region15: #{hidden_gat_encoder.3} parent=0 // pred_check_branch
    %17 = sbr.rel (0) target = $region17
  $region16: #{hidden_gat_encoder.3} parent=0 // pred_region
    _
  $region17: #{hidden_gat_encoder.3} parent=0 // pred_fallthru
    _
  // Predicated region
  $region18: #{hidden_gat_encoder.3} parent=0 // pred_check
    _
  $region19: #{hidden_gat_encoder.3} parent=0 // pred_check_branch
    %19 = sbr.rel (0) target = $region21
  $region20: #{hidden_gat_encoder.3} parent=0 // pred_region
    _
  $region21: #{hidden_gat_encoder.3} parent=0 // pred_fallthru
    _
  %p23 = scmp.eq.s32.totalorder 0, 0
  // Predicated region
  $region22: #{hidden_gat_encoder.3} parent=0 // pred_check
    %p24 = pneg %p23
  $region23: #{hidden_gat_encoder.3} parent=0 // pred_check_branch
    %26 = sbr.rel (%p24) target = $region25
  $region24: #{hidden_gat_encoder.3} parent=0 // pred_region
    %vm27 = vcmask 62464
    %28 = vst.msk [vmem:[#allocation2] sm:$0x3f] %vm27, -1e+29
    %29 = vst.msk [vmem:[#allocation3] sm:$0x3f] %vm27, 0.0
    %vm30 = vcmask 64512
    %31 = vst.msk [vmem:[#allocation4] sm:$0xff] %vm30, 0.0
    %32 = vst.msk [vmem:[#allocation4 + $0x8] sm:$0xff] %vm30, 0.0
    %33 = vst.msk [vmem:[#allocation4 + $0x10] sm:$0xff] %vm30, 0.0
    %34 = vst.msk [vmem:[#allocation4 + $0x18] sm:$0xff] %vm30, 0.0
    %35 = vst.msk [vmem:[#allocation4 + $0x20] sm:$0xff] %vm30, 0.0
    %36 = vst.msk [vmem:[#allocation4 + $0x28] sm:$0xff] %vm30, 0.0
  $region25: #{hidden_gat_encoder.3} parent=0 // pred_fallthru
    _
  %v37 = vlaneseq
  %v38 = vshrl.u32 %v37, 7
  %s39 = smul.u32 0, 8
  %v40 = vstv %s39
  %v41 = vadd.s32 %v38, %v40
  %v42 = vlaneseq
  %v43 = vand.u32 %v42, 127
  %s44 = smul.u32 0, 8
  %v45 = vstv %s44
  %v46 = vadd.s32 %v43, %v45
  %v47 = vld [vmem:[%s3] sm:$0x3]
  %vm48 = vnez %v47
  %vm49 = vcmp.eq.s32.totalorder %v41, %v46
  %vm50 = vmpackc.low %vm49, %vm49
  %vm51 = vmpackc.even %vm50, %vm50
  %vm52 = vmor %vm48, %vm51
  %v53 = vld [vmem:[%s1] sm:$0xff]
  %v54 = vld [vmem:[%s0] sm:$0x3f]
  %v55 = vld [vmem:[%s2] sm:$0xf]
  %v56 = vld [vmem:[%s2 + $0x4] sm:$0xf]
  %v57 = vld [vmem:[%s2 + $0x8] sm:$0xf]
  %v58 = vld [vmem:[%s2 + $0xc] sm:$0xf]
  %v59 = vld [vmem:[%s2 + $0x10] sm:$0xf]
  %v60 = vld [vmem:[%s2 + $0x14] sm:$0xf]
  %62 = vset.pattern.permute.xlu0 0
  %63 = vperm.xlu0 %62, %v53
  %v64 = vpop.permute.xlu0 %63
  %v66 = vlaneseq
  %v67 = vshrl.u32 %v66, 7
  %v68 = vsub.s32 0, %v67
  %v69 = vrot.slane %v54, %v68
  %v70 = vadd.f32 %v64, %v69
  %vm71 = vcmp.gt.f32.partialorder %v70, 0.0
  %v72 = vmul.f32 %v70, 0.2
  %v73 = vsel %vm71, %v70, %v72
  %v74 = vsel %vm52, 16843009, 0
  %v75 = vunpack.c.0.s8 %v74
  %vm76 = vcmp.ne.s32.totalorder %v75, 0
  %v77 = vsel %vm76, %v73, -1e+30
  %v78 = vld [vmem:[#allocation2] sm:$0x1]
  %vm79 = vcmask 64512
  %v80 = vsel %vm79, %v77, -inf
  %v81 = vrot.slane %v80, 4
  %v82 = vmax.f32 %v80, %v81
  %v83 = vrot.slane %v82, 2
  %v84 = vmax.f32 %v82, %v83
  %v85 = vrot.slane %v84, 1
  %v86 = vmax.f32 %v84, %v85
  %v87 = vmax.f32 %v78, %v86
  %v88 = vsub.f32 %v78, %v87
  %v89 = vmul.f32 %v88, 1.442695
  %v90 = vpow.pop %v89
  %v91 = vlaneseq
  %v92 = vshrl.u32 %v91, 7
  %v93 = vsub.s32 0, %v92
  %v94 = vrot.slane %v87, %v93
  %v95 = vsub.f32 %v77, %v94
  %v96 = vmul.f32 %v95, 1.442695
  %v97 = vpow.pop %v96
  %v98 = vld [vmem:[#allocation3] sm:$0x1]
  %v99 = vmul.f32 %v90, %v98
  %v100 = vsel %vm79, %v97, 0.0
  %v101 = vrot.slane %v100, 4
  %v102 = vadd.f32 %v100, %v101
  %v103 = vrot.slane %v102, 2
  %v104 = vadd.f32 %v102, %v103
  %v105 = vrot.slane %v104, 1
  %v106 = vadd.f32 %v104, %v105
  %v107 = vadd.f32 %v99, %v106
  %vm108 = vcmask 57344
  %109 = vst.msk [vmem:[#allocation3] sm:$0x1] %vm108, %v107
  %v110 = vpack.c.bf16 %v97, %v97
  %v112 = vsel %vm79, %v55, 0
  %vm114 = vcmask 1043456
  %v116 = vsel %vm114, %v110, 0
  %118 = vmatprep.subr.bf16.mxu0 0
  %119 = vmatpush1.bf16.msra.mxu0 %v116
  %120 = vmatprep.subr.bf16.mxu0 0
  %121 = vmatpush1.bf16.msra.mxu0 0
  %122 = vmatprep.subr.bf16.mxu0 0
  %123 = vmatpush1.bf16.msra.mxu0 0
  %124 = vmatprep.subr.bf16.mxu0 0
  %125 = vmatpush1.bf16.msra.mxu0 0
  %126 = vmatprep.subr.bf16.mxu0 0
  %127 = vmatpush1.bf16.msra.mxu0 0
  %128 = vmatprep.subr.bf16.mxu0 0
  %129 = vmatpush1.bf16.msra.mxu0 0
  %130 = vmatprep.subr.bf16.mxu0 0
  %131 = vmatpush1.bf16.msra.mxu0 0
  %132 = vmatprep.subr.bf16.mxu0 0
  %133 = vmatpush1.bf16.msra.mxu0 0
  %134 = vmatprep.subr.bf16.mxu0 0
  %135 = vmatpush1.bf16.msra.mxu0 0
  %136 = vmatprep.subr.bf16.mxu0 0
  %137 = vmatpush1.bf16.msra.mxu0 0
  %138 = vmatprep.subr.bf16.mxu0 0
  %139 = vmatpush1.bf16.msra.mxu0 0
  %140 = vmatprep.subr.bf16.mxu0 0
  %141 = vmatpush1.bf16.msra.mxu0 0
  %142 = vmatprep.subr.bf16.mxu0 0
  %143 = vmatpush1.bf16.msra.mxu0 0
  %144 = vmatprep.subr.bf16.mxu0 0
  %145 = vmatpush1.bf16.msra.mxu0 0
  %146 = vmatprep.subr.bf16.mxu0 0
  %147 = vmatpush1.bf16.msra.mxu0 0
  %148 = vmatprep.subr.bf16.mxu0 0
  %149 = vmatpush1.bf16.msra.mxu0 0
  %150 = vmatprep.mubr.bf16.mxu0 0
  %151 = vmatmul.mubr.bf16.gmra.mrb[0].mxu0 %v112
  %v152 = vpop.f32.mrb[0].mxu0
  %v153 = vadd.f32 0.0, %v152
  %v154 = vpop.f32.mrb[0].mxu0
  %v155 = vpop.f32.mrb[0].mxu0
  %v156 = vpop.f32.mrb[0].mxu0
  %157 = vdwg.mxu0
  %v158 = vld [vmem:[#allocation4] sm:$0xff]
  %v159 = vlaneseq
  %v160 = vshrl.u32 %v159, 7
  %v161 = vsub.s32 0, %v160
  %v162 = vrot.slane %v90, %v161
  %v163 = vmul.f32 %v162, %v158
  %v164 = vadd.f32 %v163, %v153
  %165 = vst.msk [vmem:[#allocation4] sm:$0xff] %vm79, %v164
  %166 = vst.msk [vmem:[#allocation2] sm:$0x1] %vm108, %v87
  %167 = vset.pattern.permute.xlu0 1
  %168 = vperm.xlu0 %167, %v53
  %v169 = vpop.permute.xlu0 %168
  %v171 = vlaneseq
  %v172 = vshrl.u32 %v171, 7
  %v173 = vsub.s32 1, %v172
  %v174 = vrot.slane %v54, %v173
  %v175 = vadd.f32 %v169, %v174
  %vm176 = vcmp.gt.f32.partialorder %v175, 0.0
  %v177 = vmul.f32 %v175, 0.2
  %v178 = vsel %vm176, %v175, %v177
  %v179 = vsel %vm76, %v178, -1e+30
  %v180 = vld [vmem:[#allocation2 + $0x1] sm:$0x1]
  %v181 = vsel %vm79, %v179, -inf
  %v182 = vrot.slane %v181, 4
  %v183 = vmax.f32 %v181, %v182
  %v184 = vrot.slane %v183, 2
  %v185 = vmax.f32 %v183, %v184
  %v186 = vrot.slane %v185, 1
  %v187 = vmax.f32 %v185, %v186
  %v188 = vmax.f32 %v180, %v187
  %v189 = vsub.f32 %v180, %v188
  %v190 = vmul.f32 %v189, 1.442695
  %v191 = vpow.pop %v190
  %v192 = vlaneseq
  %v193 = vshrl.u32 %v192, 7
  %v194 = vsub.s32 0, %v193
  %v195 = vrot.slane %v188, %v194
  %v196 = vsub.f32 %v179, %v195
  %v197 = vmul.f32 %v196, 1.442695
  %v198 = vpow.pop %v197
  %v199 = vld [vmem:[#allocation3 + $0x1] sm:$0x1]
  %v200 = vmul.f32 %v191, %v199
  %v201 = vsel %vm79, %v198, 0.0
  %v202 = vrot.slane %v201, 4
  %v203 = vadd.f32 %v201, %v202
  %v204 = vrot.slane %v203, 2
  %v205 = vadd.f32 %v203, %v204
  %v206 = vrot.slane %v205, 1
  %v207 = vadd.f32 %v205, %v206
  %v208 = vadd.f32 %v200, %v207
  %209 = vst.msk [vmem:[#allocation3 + $0x1] sm:$0x1] %vm108, %v208
  %v210 = vpack.c.bf16 %v198, %v198
  %v212 = vsel %vm79, %v56, 0
  %v215 = vsel %vm114, %v210, 0
  %217 = vmatprep.subr.bf16.mxu0 0
  %218 = vmatpush1.bf16.msra.mxu0 %v215
  %219 = vmatprep.subr.bf16.mxu0 0
  %220 = vmatpush1.bf16.msra.mxu0 0
  %221 = vmatprep.subr.bf16.mxu0 0
  %222 = vmatpush1.bf16.msra.mxu0 0
  %223 = vmatprep.subr.bf16.mxu0 0
  %224 = vmatpush1.bf16.msra.mxu0 0
  %225 = vmatprep.subr.bf16.mxu0 0
  %226 = vmatpush1.bf16.msra.mxu0 0
  %227 = vmatprep.subr.bf16.mxu0 0
  %228 = vmatpush1.bf16.msra.mxu0 0
  %229 = vmatprep.subr.bf16.mxu0 0
  %230 = vmatpush1.bf16.msra.mxu0 0
  %231 = vmatprep.subr.bf16.mxu0 0
  %232 = vmatpush1.bf16.msra.mxu0 0
  %233 = vmatprep.subr.bf16.mxu0 0
  %234 = vmatpush1.bf16.msra.mxu0 0
  %235 = vmatprep.subr.bf16.mxu0 0
  %236 = vmatpush1.bf16.msra.mxu0 0
  %237 = vmatprep.subr.bf16.mxu0 0
  %238 = vmatpush1.bf16.msra.mxu0 0
  %239 = vmatprep.subr.bf16.mxu0 0
  %240 = vmatpush1.bf16.msra.mxu0 0
  %241 = vmatprep.subr.bf16.mxu0 0
  %242 = vmatpush1.bf16.msra.mxu0 0
  %243 = vmatprep.subr.bf16.mxu0 0
  %244 = vmatpush1.bf16.msra.mxu0 0
  %245 = vmatprep.subr.bf16.mxu0 0
  %246 = vmatpush1.bf16.msra.mxu0 0
  %247 = vmatprep.subr.bf16.mxu0 0
  %248 = vmatpush1.bf16.msra.mxu0 0
  %249 = vmatprep.mubr.bf16.mxu0 0
  %250 = vmatmul.mubr.bf16.gmra.mrb[0].mxu0 %v212
  %v251 = vpop.f32.mrb[0].mxu0
  %v252 = vadd.f32 0.0, %v251
  %v253 = vpop.f32.mrb[0].mxu0
  %v254 = vpop.f32.mrb[0].mxu0
  %v255 = vpop.f32.mrb[0].mxu0
  %256 = vdwg.mxu0
  %v257 = vld [vmem:[#allocation4 + $0x8] sm:$0xff]
  %v258 = vlaneseq
  %v259 = vshrl.u32 %v258, 7
  %v260 = vsub.s32 0, %v259
  %v261 = vrot.slane %v191, %v260
  %v262 = vmul.f32 %v261, %v257
  %v263 = vadd.f32 %v262, %v252
  %264 = vst.msk [vmem:[#allocation4 + $0x8] sm:$0xff] %vm79, %v263
  %265 = vst.msk [vmem:[#allocation2 + $0x1] sm:$0x1] %vm108, %v188
  %266 = vset.pattern.permute.xlu0 2
  %267 = vperm.xlu0 %266, %v53
  %v268 = vpop.permute.xlu0 %267
  %v270 = vlaneseq
  %v271 = vshrl.u32 %v270, 7
  %v272 = vsub.s32 2, %v271
  %v273 = vrot.slane %v54, %v272
  %v274 = vadd.f32 %v268, %v273
  %vm275 = vcmp.gt.f32.partialorder %v274, 0.0
  %v276 = vmul.f32 %v274, 0.2
  %v277 = vsel %vm275, %v274, %v276
  %v278 = vsel %vm76, %v277, -1e+30
  %v279 = vld [vmem:[#allocation2 + $0x2] sm:$0x1]
  %v280 = vsel %vm79, %v278, -inf
  %v281 = vrot.slane %v280, 4
  %v282 = vmax.f32 %v280, %v281
  %v283 = vrot.slane %v282, 2
  %v284 = vmax.f32 %v282, %v283
  %v285 = vrot.slane %v284, 1
  %v286 = vmax.f32 %v284, %v285
  %v287 = vmax.f32 %v279, %v286
  %v288 = vsub.f32 %v279, %v287
  %v289 = vmul.f32 %v288, 1.442695
  %v290 = vpow.pop %v289
  %v291 = vlaneseq
  %v292 = vshrl.u32 %v291, 7
  %v293 = vsub.s32 0, %v292
  %v294 = vrot.slane %v287, %v293
  %v295 = vsub.f32 %v278, %v294
  %v296 = vmul.f32 %v295, 1.442695
  %v297 = vpow.pop %v296
  %v298 = vld [vmem:[#allocation3 + $0x2] sm:$0x1]
  %v299 = vmul.f32 %v290, %v298
  %v300 = vsel %vm79, %v297, 0.0
  %v301 = vrot.slane %v300, 4
  %v302 = vadd.f32 %v300, %v301
  %v303 = vrot.slane %v302, 2
  %v304 = vadd.f32 %v302, %v303
  %v305 = vrot.slane %v304, 1
  %v306 = vadd.f32 %v304, %v305
  %v307 = vadd.f32 %v299, %v306
  %308 = vst.msk [vmem:[#allocation3 + $0x2] sm:$0x1] %vm108, %v307
  %v309 = vpack.c.bf16 %v297, %v297
  %v311 = vsel %vm79, %v57, 0
  %v314 = vsel %vm114, %v309, 0
  %316 = vmatprep.subr.bf16.mxu0 0
  %317 = vmatpush1.bf16.msra.mxu0 %v314
  %318 = vmatprep.subr.bf16.mxu0 0
  %319 = vmatpush1.bf16.msra.mxu0 0
  %320 = vmatprep.subr.bf16.mxu0 0
  %321 = vmatpush1.bf16.msra.mxu0 0
  %322 = vmatprep.subr.bf16.mxu0 0
  %323 = vmatpush1.bf16.msra.mxu0 0
  %324 = vmatprep.subr.bf16.mxu0 0
  %325 = vmatpush1.bf16.msra.mxu0 0
  %326 = vmatprep.subr.bf16.mxu0 0
  %327 = vmatpush1.bf16.msra.mxu0 0
  %328 = vmatprep.subr.bf16.mxu0 0
  %329 = vmatpush1.bf16.msra.mxu0 0
  %330 = vmatprep.subr.bf16.mxu0 0
  %331 = vmatpush1.bf16.msra.mxu0 0
  %332 = vmatprep.subr.bf16.mxu0 0
  %333 = vmatpush1.bf16.msra.mxu0 0
  %334 = vmatprep.subr.bf16.mxu0 0
  %335 = vmatpush1.bf16.msra.mxu0 0
  %336 = vmatprep.subr.bf16.mxu0 0
  %337 = vmatpush1.bf16.msra.mxu0 0
  %338 = vmatprep.subr.bf16.mxu0 0
  %339 = vmatpush1.bf16.msra.mxu0 0
  %340 = vmatprep.subr.bf16.mxu0 0
  %341 = vmatpush1.bf16.msra.mxu0 0
  %342 = vmatprep.subr.bf16.mxu0 0
  %343 = vmatpush1.bf16.msra.mxu0 0
  %344 = vmatprep.subr.bf16.mxu0 0
  %345 = vmatpush1.bf16.msra.mxu0 0
  %346 = vmatprep.subr.bf16.mxu0 0
  %347 = vmatpush1.bf16.msra.mxu0 0
  %348 = vmatprep.mubr.bf16.mxu0 0
  %349 = vmatmul.mubr.bf16.gmra.mrb[0].mxu0 %v311
  %v350 = vpop.f32.mrb[0].mxu0
  %v351 = vadd.f32 0.0, %v350
  %v352 = vpop.f32.mrb[0].mxu0
  %v353 = vpop.f32.mrb[0].mxu0
  %v354 = vpop.f32.mrb[0].mxu0
  %355 = vdwg.mxu0
  %v356 = vld [vmem:[#allocation4 + $0x10] sm:$0xff]
  %v357 = vlaneseq
  %v358 = vshrl.u32 %v357, 7
  %v359 = vsub.s32 0, %v358
  %v360 = vrot.slane %v290, %v359
  %v361 = vmul.f32 %v360, %v356
  %v362 = vadd.f32 %v361, %v351
  %363 = vst.msk [vmem:[#allocation4 + $0x10] sm:$0xff] %vm79, %v362
  %364 = vst.msk [vmem:[#allocation2 + $0x2] sm:$0x1] %vm108, %v287
  %365 = vset.pattern.permute.xlu0 3
  %366 = vperm.xlu0 %365, %v53
  %v367 = vpop.permute.xlu0 %366
  %v369 = vlaneseq
  %v370 = vshrl.u32 %v369, 7
  %v371 = vsub.s32 3, %v370
  %v372 = vrot.slane %v54, %v371
  %v373 = vadd.f32 %v367, %v372
  %vm374 = vcmp.gt.f32.partialorder %v373, 0.0
  %v375 = vmul.f32 %v373, 0.2
  %v376 = vsel %vm374, %v373, %v375
  %v377 = vsel %vm76, %v376, -1e+30
  %v378 = vld [vmem:[#allocation2 + $0x3] sm:$0x1]
  %v379 = vsel %vm79, %v377, -inf
  %v380 = vrot.slane %v379, 4
  %v381 = vmax.f32 %v379, %v380
  %v382 = vrot.slane %v381, 2
  %v383 = vmax.f32 %v381, %v382
  %v384 = vrot.slane %v383, 1
  %v385 = vmax.f32 %v383, %v384
  %v386 = vmax.f32 %v378, %v385
  %v387 = vsub.f32 %v378, %v386
  %v388 = vmul.f32 %v387, 1.442695
  %v389 = vpow.pop %v388
  %v390 = vlaneseq
  %v391 = vshrl.u32 %v390, 7
  %v392 = vsub.s32 0, %v391
  %v393 = vrot.slane %v386, %v392
  %v394 = vsub.f32 %v377, %v393
  %v395 = vmul.f32 %v394, 1.442695
  %v396 = vpow.pop %v395
  %v397 = vld [vmem:[#allocation3 + $0x3] sm:$0x1]
  %v398 = vmul.f32 %v389, %v397
  %v399 = vsel %vm79, %v396, 0.0
  %v400 = vrot.slane %v399, 4
  %v401 = vadd.f32 %v399, %v400
  %v402 = vrot.slane %v401, 2
  %v403 = vadd.f32 %v401, %v402
  %v404 = vrot.slane %v403, 1
  %v405 = vadd.f32 %v403, %v404
  %v406 = vadd.f32 %v398, %v405
  %407 = vst.msk [vmem:[#allocation3 + $0x3] sm:$0x1] %vm108, %v406
  %v408 = vpack.c.bf16 %v396, %v396
  %v410 = vsel %vm79, %v58, 0
  %v413 = vsel %vm114, %v408, 0
  %415 = vmatprep.subr.bf16.mxu0 0
  %416 = vmatpush1.bf16.msra.mxu0 %v413
  %417 = vmatprep.subr.bf16.mxu0 0
  %418 = vmatpush1.bf16.msra.mxu0 0
  %419 = vmatprep.subr.bf16.mxu0 0
  %420 = vmatpush1.bf16.msra.mxu0 0
  %421 = vmatprep.subr.bf16.mxu0 0
  %422 = vmatpush1.bf16.msra.mxu0 0
  %423 = vmatprep.subr.bf16.mxu0 0
  %424 = vmatpush1.bf16.msra.mxu0 0
  %425 = vmatprep.subr.bf16.mxu0 0
  %426 = vmatpush1.bf16.msra.mxu0 0
  %427 = vmatprep.subr.bf16.mxu0 0
  %428 = vmatpush1.bf16.msra.mxu0 0
  %429 = vmatprep.subr.bf16.mxu0 0
  %430 = vmatpush1.bf16.msra.mxu0 0
  %431 = vmatprep.subr.bf16.mxu0 0
  %432 = vmatpush1.bf16.msra.mxu0 0
  %433 = vmatprep.subr.bf16.mxu0 0
  %434 = vmatpush1.bf16.msra.mxu0 0
  %435 = vmatprep.subr.bf16.mxu0 0
  %436 = vmatpush1.bf16.msra.mxu0 0
  %437 = vmatprep.subr.bf16.mxu0 0
  %438 = vmatpush1.bf16.msra.mxu0 0
  %439 = vmatprep.subr.bf16.mxu0 0
  %440 = vmatpush1.bf16.msra.mxu0 0
  %441 = vmatprep.subr.bf16.mxu0 0
  %442 = vmatpush1.bf16.msra.mxu0 0
  %443 = vmatprep.subr.bf16.mxu0 0
  %444 = vmatpush1.bf16.msra.mxu0 0
  %445 = vmatprep.subr.bf16.mxu0 0
  %446 = vmatpush1.bf16.msra.mxu0 0
  %447 = vmatprep.mubr.bf16.mxu0 0
  %448 = vmatmul.mubr.bf16.gmra.mrb[0].mxu0 %v410
  %v449 = vpop.f32.mrb[0].mxu0
  %v450 = vadd.f32 0.0, %v449
  %v451 = vpop.f32.mrb[0].mxu0
  %v452 = vpop.f32.mrb[0].mxu0
  %v453 = vpop.f32.mrb[0].mxu0
  %454 = vdwg.mxu0
  %v455 = vld [vmem:[#allocation4 + $0x18] sm:$0xff]
  %v456 = vlaneseq
  %v457 = vshrl.u32 %v456, 7
  %v458 = vsub.s32 0, %v457
  %v459 = vrot.slane %v389, %v458
  %v460 = vmul.f32 %v459, %v455
  %v461 = vadd.f32 %v460, %v450
  %462 = vst.msk [vmem:[#allocation4 + $0x18] sm:$0xff] %vm79, %v461
  %463 = vst.msk [vmem:[#allocation2 + $0x3] sm:$0x1] %vm108, %v386
  %464 = vset.pattern.permute.xlu0 4
  %465 = vperm.xlu0 %464, %v53
  %v466 = vpop.permute.xlu0 %465
  %v468 = vlaneseq
  %v469 = vshrl.u32 %v468, 7
  %v470 = vsub.s32 4, %v469
  %v471 = vrot.slane %v54, %v470
  %v472 = vadd.f32 %v466, %v471
  %vm473 = vcmp.gt.f32.partialorder %v472, 0.0
  %v474 = vmul.f32 %v472, 0.2
  %v475 = vsel %vm473, %v472, %v474
  %v476 = vsel %vm76, %v475, -1e+30
  %v477 = vld [vmem:[#allocation2 + $0x4] sm:$0x1]
  %v478 = vsel %vm79, %v476, -inf
  %v479 = vrot.slane %v478, 4
  %v480 = vmax.f32 %v478, %v479
  %v481 = vrot.slane %v480, 2
  %v482 = vmax.f32 %v480, %v481
  %v483 = vrot.slane %v482, 1
  %v484 = vmax.f32 %v482, %v483
  %v485 = vmax.f32 %v477, %v484
  %v486 = vsub.f32 %v477, %v485
  %v487 = vmul.f32 %v486, 1.442695
  %v488 = vpow.pop %v487
  %v489 = vlaneseq
  %v490 = vshrl.u32 %v489, 7
  %v491 = vsub.s32 0, %v490
  %v492 = vrot.slane %v485, %v491
  %v493 = vsub.f32 %v476, %v492
  %v494 = vmul.f32 %v493, 1.442695
  %v495 = vpow.pop %v494
  %v496 = vld [vmem:[#allocation3 + $0x4] sm:$0x1]
  %v497 = vmul.f32 %v488, %v496
  %v498 = vsel %vm79, %v495, 0.0
  %v499 = vrot.slane %v498, 4
  %v500 = vadd.f32 %v498, %v499
  %v501 = vrot.slane %v500, 2
  %v502 = vadd.f32 %v500, %v501
  %v503 = vrot.slane %v502, 1
  %v504 = vadd.f32 %v502, %v503
  %v505 = vadd.f32 %v497, %v504
  %506 = vst.msk [vmem:[#allocation3 + $0x4] sm:$0x1] %vm108, %v505
  %v507 = vpack.c.bf16 %v495, %v495
  %v509 = vsel %vm79, %v59, 0
  %v512 = vsel %vm114, %v507, 0
  %514 = vmatprep.subr.bf16.mxu0 0
  %515 = vmatpush1.bf16.msra.mxu0 %v512
  %516 = vmatprep.subr.bf16.mxu0 0
  %517 = vmatpush1.bf16.msra.mxu0 0
  %518 = vmatprep.subr.bf16.mxu0 0
  %519 = vmatpush1.bf16.msra.mxu0 0
  %520 = vmatprep.subr.bf16.mxu0 0
  %521 = vmatpush1.bf16.msra.mxu0 0
  %522 = vmatprep.subr.bf16.mxu0 0
  %523 = vmatpush1.bf16.msra.mxu0 0
  %524 = vmatprep.subr.bf16.mxu0 0
  %525 = vmatpush1.bf16.msra.mxu0 0
  %526 = vmatprep.subr.bf16.mxu0 0
  %527 = vmatpush1.bf16.msra.mxu0 0
  %528 = vmatprep.subr.bf16.mxu0 0
  %529 = vmatpush1.bf16.msra.mxu0 0
  %530 = vmatprep.subr.bf16.mxu0 0
  %531 = vmatpush1.bf16.msra.mxu0 0
  %532 = vmatprep.subr.bf16.mxu0 0
  %533 = vmatpush1.bf16.msra.mxu0 0
  %534 = vmatprep.subr.bf16.mxu0 0
  %535 = vmatpush1.bf16.msra.mxu0 0
  %536 = vmatprep.subr.bf16.mxu0 0
  %537 = vmatpush1.bf16.msra.mxu0 0
  %538 = vmatprep.subr.bf16.mxu0 0
  %539 = vmatpush1.bf16.msra.mxu0 0
  %540 = vmatprep.subr.bf16.mxu0 0
  %541 = vmatpush1.bf16.msra.mxu0 0
  %542 = vmatprep.subr.bf16.mxu0 0
  %543 = vmatpush1.bf16.msra.mxu0 0
  %544 = vmatprep.subr.bf16.mxu0 0
  %545 = vmatpush1.bf16.msra.mxu0 0
  %546 = vmatprep.mubr.bf16.mxu0 0
  %547 = vmatmul.mubr.bf16.gmra.mrb[0].mxu0 %v509
  %v548 = vpop.f32.mrb[0].mxu0
  %v549 = vadd.f32 0.0, %v548
  %v550 = vpop.f32.mrb[0].mxu0
  %v551 = vpop.f32.mrb[0].mxu0
  %v552 = vpop.f32.mrb[0].mxu0
  %553 = vdwg.mxu0
  %v554 = vld [vmem:[#allocation4 + $0x20] sm:$0xff]
  %v555 = vlaneseq
  %v556 = vshrl.u32 %v555, 7
  %v557 = vsub.s32 0, %v556
  %v558 = vrot.slane %v488, %v557
  %v559 = vmul.f32 %v558, %v554
  %v560 = vadd.f32 %v559, %v549
  %561 = vst.msk [vmem:[#allocation4 + $0x20] sm:$0xff] %vm79, %v560
  %562 = vst.msk [vmem:[#allocation2 + $0x4] sm:$0x1] %vm108, %v485
  %563 = vset.pattern.permute.xlu0 5
  %564 = vperm.xlu0 %563, %v53
  %v565 = vpop.permute.xlu0 %564
  %v567 = vlaneseq
  %v568 = vshrl.u32 %v567, 7
  %v569 = vsub.s32 5, %v568
  %v570 = vrot.slane %v54, %v569
  %v571 = vadd.f32 %v565, %v570
  %vm572 = vcmp.gt.f32.partialorder %v571, 0.0
  %v573 = vmul.f32 %v571, 0.2
  %v574 = vsel %vm572, %v571, %v573
  %v575 = vsel %vm76, %v574, -1e+30
  %v576 = vld [vmem:[#allocation2 + $0x5] sm:$0x1]
  %v577 = vsel %vm79, %v575, -inf
  %v578 = vrot.slane %v577, 4
  %v579 = vmax.f32 %v577, %v578
  %v580 = vrot.slane %v579, 2
  %v581 = vmax.f32 %v579, %v580
  %v582 = vrot.slane %v581, 1
  %v583 = vmax.f32 %v581, %v582
  %v584 = vmax.f32 %v576, %v583
  %v585 = vsub.f32 %v576, %v584
  %v586 = vmul.f32 %v585, 1.442695
  %v587 = vpow.pop %v586
  %v588 = vlaneseq
  %v589 = vshrl.u32 %v588, 7
  %v590 = vsub.s32 0, %v589
  %v591 = vrot.slane %v584, %v590
  %v592 = vsub.f32 %v575, %v591
  %v593 = vmul.f32 %v592, 1.442695
  %v594 = vpow.pop %v593
  %v595 = vld [vmem:[#allocation3 + $0x5] sm:$0x1]
  %v596 = vmul.f32 %v587, %v595
  %v597 = vsel %vm79, %v594, 0.0
  %v598 = vrot.slane %v597, 4
  %v599 = vadd.f32 %v597, %v598
  %v600 = vrot.slane %v599, 2
  %v601 = vadd.f32 %v599, %v600
  %v602 = vrot.slane %v601, 1
  %v603 = vadd.f32 %v601, %v602
  %v604 = vadd.f32 %v596, %v603
  %605 = vst.msk [vmem:[#allocation3 + $0x5] sm:$0x1] %vm108, %v604
  %v606 = vpack.c.bf16 %v594, %v594
  %v608 = vsel %vm79, %v60, 0
  %v611 = vsel %vm114, %v606, 0
  %613 = vmatprep.subr.bf16.mxu0 0
  %614 = vmatpush1.bf16.msra.mxu0 %v611
  %615 = vmatprep.subr.bf16.mxu0 0
  %616 = vmatpush1.bf16.msra.mxu0 0
  %617 = vmatprep.subr.bf16.mxu0 0
  %618 = vmatpush1.bf16.msra.mxu0 0
  %619 = vmatprep.subr.bf16.mxu0 0
  %620 = vmatpush1.bf16.msra.mxu0 0
  %621 = vmatprep.subr.bf16.mxu0 0
  %622 = vmatpush1.bf16.msra.mxu0 0
  %623 = vmatprep.subr.bf16.mxu0 0
  %624 = vmatpush1.bf16.msra.mxu0 0
  %625 = vmatprep.subr.bf16.mxu0 0
  %626 = vmatpush1.bf16.msra.mxu0 0
  %627 = vmatprep.subr.bf16.mxu0 0
  %628 = vmatpush1.bf16.msra.mxu0 0
  %629 = vmatprep.subr.bf16.mxu0 0
  %630 = vmatpush1.bf16.msra.mxu0 0
  %631 = vmatprep.subr.bf16.mxu0 0
  %632 = vmatpush1.bf16.msra.mxu0 0
  %633 = vmatprep.subr.bf16.mxu0 0
  %634 = vmatpush1.bf16.msra.mxu0 0
  %635 = vmatprep.subr.bf16.mxu0 0
  %636 = vmatpush1.bf16.msra.mxu0 0
  %637 = vmatprep.subr.bf16.mxu0 0
  %638 = vmatpush1.bf16.msra.mxu0 0
  %639 = vmatprep.subr.bf16.mxu0 0
  %640 = vmatpush1.bf16.msra.mxu0 0
  %641 = vmatprep.subr.bf16.mxu0 0
  %642 = vmatpush1.bf16.msra.mxu0 0
  %643 = vmatprep.subr.bf16.mxu0 0
  %644 = vmatpush1.bf16.msra.mxu0 0
  %645 = vmatprep.mubr.bf16.mxu0 0
  %646 = vmatmul.mubr.bf16.gmra.mrb[0].mxu0 %v608
  %v647 = vpop.f32.mrb[0].mxu0
  %v648 = vadd.f32 0.0, %v647
  %v649 = vpop.f32.mrb[0].mxu0
  %v650 = vpop.f32.mrb[0].mxu0
  %v651 = vpop.f32.mrb[0].mxu0
  %652 = vdwg.mxu0
  %v653 = vld [vmem:[#allocation4 + $0x28] sm:$0xff]
  %v654 = vlaneseq
  %v655 = vshrl.u32 %v654, 7
  %v656 = vsub.s32 0, %v655
  %v657 = vrot.slane %v587, %v656
  %v658 = vmul.f32 %v657, %v653
  %v659 = vadd.f32 %v658, %v648
  %660 = vst.msk [vmem:[#allocation4 + $0x28] sm:$0xff] %vm79, %v659
  %661 = vst.msk [vmem:[#allocation2 + $0x5] sm:$0x1] %vm108, %v584
  // Predicated region
  $region26: #{hidden_gat_encoder.3} parent=0 // pred_check
    %p662 = pneg %p23
  $region27: #{hidden_gat_encoder.3} parent=0 // pred_check_branch
    %664 = sbr.rel (%p662) target = $region29
  $region28: #{hidden_gat_encoder.3} parent=0 // pred_region
    %v665 = vld [vmem:[#allocation3] sm:$0x3f]
    %v666 = vrcp.pop %v665
    %v667 = vmul.f32 1.0, %v666
    %v668 = vld [vmem:[%s4] sm:$0xff]
    %v669 = vld [vmem:[%s4 + $0x8] sm:$0xff]
    %v670 = vld [vmem:[#allocation4] sm:$0xff]
    %v671 = vlaneseq
    %v672 = vshrl.u32 %v671, 7
    %v673 = vsub.s32 0, %v672
    %v674 = vrot.slane %v667, %v673
    %v675 = vmul.f32 %v670, %v674
    %v676 = vadd.f32 %v675, 0.0
    %v677 = vld [vmem:[#allocation4 + $0x8] sm:$0xff]
    %v678 = vlaneseq
    %v679 = vshrl.u32 %v678, 7
    %v680 = vsub.s32 1, %v679
    %v681 = vrot.slane %v667, %v680
    %v682 = vmul.f32 %v677, %v681
    %v683 = vadd.f32 %v676, %v682
    %v684 = vld [vmem:[#allocation4 + $0x10] sm:$0xff]
    %v685 = vlaneseq
    %v686 = vshrl.u32 %v685, 7
    %v687 = vsub.s32 2, %v686
    %v688 = vrot.slane %v667, %v687
    %v689 = vmul.f32 %v684, %v688
    %v690 = vadd.f32 %v683, %v689
    %v691 = vmul.f32 %v690, 0.33333334
    %693 = vset.pattern.permute.xlu0 0
    %694 = vperm.xlu0 %693, %v668
    %v695 = vpop.permute.xlu0 %694
    %v697 = vadd.f32 %v691, %v695
    %698 = vst.msk [vmem:[%s5] sm:$0xff] %vm79, %v697
    %v699 = vld [vmem:[#allocation4 + $0x18] sm:$0xff]
    %v700 = vlaneseq
    %v701 = vshrl.u32 %v700, 7
    %v702 = vsub.s32 3, %v701
    %v703 = vrot.slane %v667, %v702
    %v704 = vmul.f32 %v699, %v703
    %v705 = vadd.f32 %v704, 0.0
    %v706 = vld [vmem:[#allocation4 + $0x20] sm:$0xff]
    %v707 = vlaneseq
    %v708 = vshrl.u32 %v707, 7
    %v709 = vsub.s32 4, %v708
    %v710 = vrot.slane %v667, %v709
    %v711 = vmul.f32 %v706, %v710
    %v712 = vadd.f32 %v705, %v711
    %v713 = vld [vmem:[#allocation4 + $0x28] sm:$0xff]
    %v714 = vlaneseq
    %v715 = vshrl.u32 %v714, 7
    %v716 = vsub.s32 5, %v715
    %v717 = vrot.slane %v667, %v716
    %v718 = vmul.f32 %v713, %v717
    %v719 = vadd.f32 %v712, %v718
    %v720 = vmul.f32 %v719, 0.33333334
    %722 = vset.pattern.permute.xlu0 0
    %723 = vperm.xlu0 %722, %v669
    %v724 = vpop.permute.xlu0 %723
    %v726 = vadd.f32 %v720, %v724
    %727 = vst.msk [vmem:[%s5 + $0x8] sm:$0xff] %vm79, %v726
  $region29: #{hidden_gat_encoder.3} parent=0 // pred_fallthru
    _
  // Predicated region
  $region30: #{hidden_gat_encoder.3} parent=0 // pred_check
    _
  $region31: #{hidden_gat_encoder.3} parent=0 // pred_check_branch
    %729 = sbr.rel (0) target = $region33
  $region32: #{hidden_gat_encoder.3} parent=0 // pred_region
    _
  $region33: #{hidden_gat_encoder.3} parent=0 // pred_fallthru
    _
  // Predicated region
  $region34: #{hidden_gat_encoder.3} parent=0 // pred_check
    _
  $region35: #{hidden_gat_encoder.3} parent=0 // pred_check_branch
    %731 = sbr.rel (0) target = $region37
  $region36: #{hidden_gat_encoder.3} parent=0 // pred_region
    _
  $region37: #{hidden_gat_encoder.3} parent=0 // pred_fallthru
    _

// kernel: hidden_gat_encoder.2
$region0: #{hidden_gat_encoder.2}
  #allocation0 [shape = 'u32[]', space=smem, size = 0x4, offset = 0x4, fixed_abs, tag = 'smem constant byte address 0x4 - core index']
  #allocation1 [shape = 'u32[144,128]{1,0:T(1,128)}', space=vmem, size = 0x12000, scoped, tag = 'internal scratch']
  #allocation2 [shape = 'f32[3,8]{1,0:T(4,128)}', space=vmem, size = 0x800, scoped, tag = 'scratch operand']
  #allocation3 [shape = 'f32[3,8]{1,0:T(4,128)}', space=vmem, size = 0x800, scoped, tag = 'scratch operand']
  #allocation4 [shape = 'f32[24,8]{1,0:T(8,128)}', space=vmem, size = 0x3000, scoped, tag = 'scratch operand']
  %s0 = inlined_call_operand.vmem [shape: f32[3,8], index: 0, kind: input, shape index: {}]
  %s1 = inlined_call_operand.vmem [shape: f32[8,3], index: 1, kind: input, shape index: {}]
  %s2 = inlined_call_operand.vmem [shape: bf16[24,8], index: 2, kind: input, shape index: {}]
  %s3 = inlined_call_operand.vmem [shape: s8[8,8], index: 3, kind: input, shape index: {}]
  %s4 = inlined_call_operand.vmem [shape: f32[24,1], index: 4, kind: input, shape index: {}]
  %s5 = inlined_call_operand.vmem [shape: f32[24,8], index: 5, kind: output, shape index: {}]
  %s6 = sld [smem:[#allocation0]]
  $region38: #{hidden_gat_encoder.2} parent=0
    _
  %s8 = ssub.s32 1, %s6
  %s9 = scalar_select 0, %s8, %s6
  // Predicated region
  $region2: #{hidden_gat_encoder.2} parent=0 // pred_check
    _
  $region3: #{hidden_gat_encoder.2} parent=0 // pred_check_branch
    %11 = sbr.rel (0) target = $region5
  $region4: #{hidden_gat_encoder.2} parent=0 // pred_region
    _
  $region5: #{hidden_gat_encoder.2} parent=0 // pred_fallthru
    _
  // Predicated region
  $region6: #{hidden_gat_encoder.2} parent=0 // pred_check
    _
  $region7: #{hidden_gat_encoder.2} parent=0 // pred_check_branch
    %13 = sbr.rel (0) target = $region9
  $region8: #{hidden_gat_encoder.2} parent=0 // pred_region
    _
  $region9: #{hidden_gat_encoder.2} parent=0 // pred_fallthru
    _
  // Predicated region
  $region10: #{hidden_gat_encoder.2} parent=0 // pred_check
    _
  $region11: #{hidden_gat_encoder.2} parent=0 // pred_check_branch
    %15 = sbr.rel (0) target = $region13
  $region12: #{hidden_gat_encoder.2} parent=0 // pred_region
    _
  $region13: #{hidden_gat_encoder.2} parent=0 // pred_fallthru
    _
  // Predicated region
  $region14: #{hidden_gat_encoder.2} parent=0 // pred_check
    _
  $region15: #{hidden_gat_encoder.2} parent=0 // pred_check_branch
    %17 = sbr.rel (0) target = $region17
  $region16: #{hidden_gat_encoder.2} parent=0 // pred_region
    _
  $region17: #{hidden_gat_encoder.2} parent=0 // pred_fallthru
    _
  // Predicated region
  $region18: #{hidden_gat_encoder.2} parent=0 // pred_check
    _
  $region19: #{hidden_gat_encoder.2} parent=0 // pred_check_branch
    %19 = sbr.rel (0) target = $region21
  $region20: #{hidden_gat_encoder.2} parent=0 // pred_region
    _
  $region21: #{hidden_gat_encoder.2} parent=0 // pred_fallthru
    _
  %p23 = scmp.eq.s32.totalorder 0, 0
  // Predicated region
  $region22: #{hidden_gat_encoder.2} parent=0 // pred_check
    %p24 = pneg %p23
  $region23: #{hidden_gat_encoder.2} parent=0 // pred_check_branch
    %26 = sbr.rel (%p24) target = $region25
  $region24: #{hidden_gat_encoder.2} parent=0 // pred_region
    %vm27 = vcmask 59392
    %28 = vst.msk [vmem:[#allocation2] sm:$0x7] %vm27, -1e+29
    %29 = vst.msk [vmem:[#allocation3] sm:$0x7] %vm27, 0.0
    %vm30 = vcmask 64512
    %31 = vst.msk [vmem:[#allocation4] sm:$0xff] %vm30, 0.0
    %32 = vst.msk [vmem:[#allocation4 + $0x8] sm:$0xff] %vm30, 0.0
    %33 = vst.msk [vmem:[#allocation4 + $0x10] sm:$0xff] %vm30, 0.0
  $region25: #{hidden_gat_encoder.2} parent=0 // pred_fallthru
    _
  %v34 = vlaneseq
  %v35 = vshrl.u32 %v34, 7
  %s36 = smul.u32 0, 8
  %v37 = vstv %s36
  %v38 = vadd.s32 %v35, %v37
  %v39 = vlaneseq
  %v40 = vand.u32 %v39, 127
  %s41 = smul.u32 0, 8
  %v42 = vstv %s41
  %v43 = vadd.s32 %v40, %v42
  %v44 = vld [vmem:[%s3] sm:$0x3]
  %vm45 = vnez %v44
  %vm46 = vcmp.eq.s32.totalorder %v38, %v43
  %vm47 = vmpackc.low %vm46, %vm46
  %vm48 = vmpackc.even %vm47, %vm47
  %vm49 = vmor %vm45, %vm48
  %v50 = vld [vmem:[%s1] sm:$0xff]
  %v51 = vld [vmem:[%s0] sm:$0x7]
  %v52 = vld [vmem:[%s2] sm:$0xf]
  %v53 = vld [vmem:[%s2 + $0x4] sm:$0xf]
  %v54 = vld [vmem:[%s2 + $0x8] sm:$0xf]
  %56 = vset.pattern.permute.xlu0 0
  %57 = vperm.xlu0 %56, %v50
  %v58 = vpop.permute.xlu0 %57
  %v60 = vlaneseq
  %v61 = vshrl.u32 %v60, 7
  %v62 = vsub.s32 0, %v61
  %v63 = vrot.slane %v51, %v62
  %v64 = vadd.f32 %v58, %v63
  %vm65 = vcmp.gt.f32.partialorder %v64, 0.0
  %v66 = vmul.f32 %v64, 0.2
  %v67 = vsel %vm65, %v64, %v66
  %v68 = vsel %vm49, 16843009, 0
  %v69 = vunpack.c.0.s8 %v68
  %vm70 = vcmp.ne.s32.totalorder %v69, 0
  %v71 = vsel %vm70, %v67, -1e+30
  %v72 = vld [vmem:[#allocation2] sm:$0x1]
  %vm73 = vcmask 64512
  %v74 = vsel %vm73, %v71, -inf
  %v75 = vrot.slane %v74, 4
  %v76 = vmax.f32 %v74, %v75
  %v77 = vrot.slane %v76, 2
  %v78 = vmax.f32 %v76, %v77
  %v79 = vrot.slane %v78, 1
  %v80 = vmax.f32 %v78, %v79
  %v81 = vmax.f32 %v72, %v80
  %v82 = vsub.f32 %v72, %v81
  %v83 = vmul.f32 %v82, 1.442695
  %v84 = vpow.pop %v83
  %v85 = vlaneseq
  %v86 = vshrl.u32 %v85, 7
  %v87 = vsub.s32 0, %v86
  %v88 = vrot.slane %v81, %v87
  %v89 = vsub.f32 %v71, %v88
  %v90 = vmul.f32 %v89, 1.442695
  %v91 = vpow.pop %v90
  %v92 = vld [vmem:[#allocation3] sm:$0x1]
  %v93 = vmul.f32 %v84, %v92
  %v94 = vsel %vm73, %v91, 0.0
  %v95 = vrot.slane %v94, 4
  %v96 = vadd.f32 %v94, %v95
  %v97 = vrot.slane %v96, 2
  %v98 = vadd.f32 %v96, %v97
  %v99 = vrot.slane %v98, 1
  %v100 = vadd.f32 %v98, %v99
  %v101 = vadd.f32 %v93, %v100
  %vm102 = vcmask 57344
  %103 = vst.msk [vmem:[#allocation3] sm:$0x1] %vm102, %v101
  %v104 = vpack.c.bf16 %v91, %v91
  %v106 = vsel %vm73, %v52, 0
  %vm108 = vcmask 1043456
  %v110 = vsel %vm108, %v104, 0
  %112 = vmatprep.subr.bf16.mxu0 0
  %113 = vmatpush1.bf16.msra.mxu0 %v110
  %114 = vmatprep.subr.bf16.mxu0 0
  %115 = vmatpush1.bf16.msra.mxu0 0
  %116 = vmatprep.subr.bf16.mxu0 0
  %117 = vmatpush1.bf16.msra.mxu0 0
  %118 = vmatprep.subr.bf16.mxu0 0
  %119 = vmatpush1.bf16.msra.mxu0 0
  %120 = vmatprep.subr.bf16.mxu0 0
  %121 = vmatpush1.bf16.msra.mxu0 0
  %122 = vmatprep.subr.bf16.mxu0 0
  %123 = vmatpush1.bf16.msra.mxu0 0
  %124 = vmatprep.subr.bf16.mxu0 0
  %125 = vmatpush1.bf16.msra.mxu0 0
  %126 = vmatprep.subr.bf16.mxu0 0
  %127 = vmatpush1.bf16.msra.mxu0 0
  %128 = vmatprep.subr.bf16.mxu0 0
  %129 = vmatpush1.bf16.msra.mxu0 0
  %130 = vmatprep.subr.bf16.mxu0 0
  %131 = vmatpush1.bf16.msra.mxu0 0
  %132 = vmatprep.subr.bf16.mxu0 0
  %133 = vmatpush1.bf16.msra.mxu0 0
  %134 = vmatprep.subr.bf16.mxu0 0
  %135 = vmatpush1.bf16.msra.mxu0 0
  %136 = vmatprep.subr.bf16.mxu0 0
  %137 = vmatpush1.bf16.msra.mxu0 0
  %138 = vmatprep.subr.bf16.mxu0 0
  %139 = vmatpush1.bf16.msra.mxu0 0
  %140 = vmatprep.subr.bf16.mxu0 0
  %141 = vmatpush1.bf16.msra.mxu0 0
  %142 = vmatprep.subr.bf16.mxu0 0
  %143 = vmatpush1.bf16.msra.mxu0 0
  %144 = vmatprep.mubr.bf16.mxu0 0
  %145 = vmatmul.mubr.bf16.gmra.mrb[0].mxu0 %v106
  %v146 = vpop.f32.mrb[0].mxu0
  %v147 = vadd.f32 0.0, %v146
  %v148 = vpop.f32.mrb[0].mxu0
  %v149 = vpop.f32.mrb[0].mxu0
  %v150 = vpop.f32.mrb[0].mxu0
  %151 = vdwg.mxu0
  %v152 = vld [vmem:[#allocation4] sm:$0xff]
  %v153 = vlaneseq
  %v154 = vshrl.u32 %v153, 7
  %v155 = vsub.s32 0, %v154
  %v156 = vrot.slane %v84, %v155
  %v157 = vmul.f32 %v156, %v152
  %v158 = vadd.f32 %v157, %v147
  %159 = vst.msk [vmem:[#allocation4] sm:$0xff] %vm73, %v158
  %160 = vst.msk [vmem:[#allocation2] sm:$0x1] %vm102, %v81
  %161 = vset.pattern.permute.xlu0 1
  %162 = vperm.xlu0 %161, %v50
  %v163 = vpop.permute.xlu0 %162
  %v165 = vlaneseq
  %v166 = vshrl.u32 %v165, 7
  %v167 = vsub.s32 1, %v166
  %v168 = vrot.slane %v51, %v167
  %v169 = vadd.f32 %v163, %v168
  %vm170 = vcmp.gt.f32.partialorder %v169, 0.0
  %v171 = vmul.f32 %v169, 0.2
  %v172 = vsel %vm170, %v169, %v171
  %v173 = vsel %vm70, %v172, -1e+30
  %v174 = vld [vmem:[#allocation2 + $0x1] sm:$0x1]
  %v175 = vsel %vm73, %v173, -inf
  %v176 = vrot.slane %v175, 4
  %v177 = vmax.f32 %v175, %v176
  %v178 = vrot.slane %v177, 2
  %v179 = vmax.f32 %v177, %v178
  %v180 = vrot.slane %v179, 1
  %v181 = vmax.f32 %v179, %v180
  %v182 = vmax.f32 %v174, %v181
  %v183 = vsub.f32 %v174, %v182
  %v184 = vmul.f32 %v183, 1.442695
  %v185 = vpow.pop %v184
  %v186 = vlaneseq
  %v187 = vshrl.u32 %v186, 7
  %v188 = vsub.s32 0, %v187
  %v189 = vrot.slane %v182, %v188
  %v190 = vsub.f32 %v173, %v189
  %v191 = vmul.f32 %v190, 1.442695
  %v192 = vpow.pop %v191
  %v193 = vld [vmem:[#allocation3 + $0x1] sm:$0x1]
  %v194 = vmul.f32 %v185, %v193
  %v195 = vsel %vm73, %v192, 0.0
  %v196 = vrot.slane %v195, 4
  %v197 = vadd.f32 %v195, %v196
  %v198 = vrot.slane %v197, 2
  %v199 = vadd.f32 %v197, %v198
  %v200 = vrot.slane %v199, 1
  %v201 = vadd.f32 %v199, %v200
  %v202 = vadd.f32 %v194, %v201
  %203 = vst.msk [vmem:[#allocation3 + $0x1] sm:$0x1] %vm102, %v202
  %v204 = vpack.c.bf16 %v192, %v192
  %v206 = vsel %vm73, %v53, 0
  %v209 = vsel %vm108, %v204, 0
  %211 = vmatprep.subr.bf16.mxu0 0
  %212 = vmatpush1.bf16.msra.mxu0 %v209
  %213 = vmatprep.subr.bf16.mxu0 0
  %214 = vmatpush1.bf16.msra.mxu0 0
  %215 = vmatprep.subr.bf16.mxu0 0
  %216 = vmatpush1.bf16.msra.mxu0 0
  %217 = vmatprep.subr.bf16.mxu0 0
  %218 = vmatpush1.bf16.msra.mxu0 0
  %219 = vmatprep.subr.bf16.mxu0 0
  %220 = vmatpush1.bf16.msra.mxu0 0
  %221 = vmatprep.subr.bf16.mxu0 0
  %222 = vmatpush1.bf16.msra.mxu0 0
  %223 = vmatprep.subr.bf16.mxu0 0
  %224 = vmatpush1.bf16.msra.mxu0 0
  %225 = vmatprep.subr.bf16.mxu0 0
  %226 = vmatpush1.bf16.msra.mxu0 0
  %227 = vmatprep.subr.bf16.mxu0 0
  %228 = vmatpush1.bf16.msra.mxu0 0
  %229 = vmatprep.subr.bf16.mxu0 0
  %230 = vmatpush1.bf16.msra.mxu0 0
  %231 = vmatprep.subr.bf16.mxu0 0
  %232 = vmatpush1.bf16.msra.mxu0 0
  %233 = vmatprep.subr.bf16.mxu0 0
  %234 = vmatpush1.bf16.msra.mxu0 0
  %235 = vmatprep.subr.bf16.mxu0 0
  %236 = vmatpush1.bf16.msra.mxu0 0
  %237 = vmatprep.subr.bf16.mxu0 0
  %238 = vmatpush1.bf16.msra.mxu0 0
  %239 = vmatprep.subr.bf16.mxu0 0
  %240 = vmatpush1.bf16.msra.mxu0 0
  %241 = vmatprep.subr.bf16.mxu0 0
  %242 = vmatpush1.bf16.msra.mxu0 0
  %243 = vmatprep.mubr.bf16.mxu0 0
  %244 = vmatmul.mubr.bf16.gmra.mrb[0].mxu0 %v206
  %v245 = vpop.f32.mrb[0].mxu0
  %v246 = vadd.f32 0.0, %v245
  %v247 = vpop.f32.mrb[0].mxu0
  %v248 = vpop.f32.mrb[0].mxu0
  %v249 = vpop.f32.mrb[0].mxu0
  %250 = vdwg.mxu0
  %v251 = vld [vmem:[#allocation4 + $0x8] sm:$0xff]
  %v252 = vlaneseq
  %v253 = vshrl.u32 %v252, 7
  %v254 = vsub.s32 0, %v253
  %v255 = vrot.slane %v185, %v254
  %v256 = vmul.f32 %v255, %v251
  %v257 = vadd.f32 %v256, %v246
  %258 = vst.msk [vmem:[#allocation4 + $0x8] sm:$0xff] %vm73, %v257
  %259 = vst.msk [vmem:[#allocation2 + $0x1] sm:$0x1] %vm102, %v182
  %260 = vset.pattern.permute.xlu0 2
  %261 = vperm.xlu0 %260, %v50
  %v262 = vpop.permute.xlu0 %261
  %v264 = vlaneseq
  %v265 = vshrl.u32 %v264, 7
  %v266 = vsub.s32 2, %v265
  %v267 = vrot.slane %v51, %v266
  %v268 = vadd.f32 %v262, %v267
  %vm269 = vcmp.gt.f32.partialorder %v268, 0.0
  %v270 = vmul.f32 %v268, 0.2
  %v271 = vsel %vm269, %v268, %v270
  %v272 = vsel %vm70, %v271, -1e+30
  %v273 = vld [vmem:[#allocation2 + $0x2] sm:$0x1]
  %v274 = vsel %vm73, %v272, -inf
  %v275 = vrot.slane %v274, 4
  %v276 = vmax.f32 %v274, %v275
  %v277 = vrot.slane %v276, 2
  %v278 = vmax.f32 %v276, %v277
  %v279 = vrot.slane %v278, 1
  %v280 = vmax.f32 %v278, %v279
  %v281 = vmax.f32 %v273, %v280
  %v282 = vsub.f32 %v273, %v281
  %v283 = vmul.f32 %v282, 1.442695
  %v284 = vpow.pop %v283
  %v285 = vlaneseq
  %v286 = vshrl.u32 %v285, 7
  %v287 = vsub.s32 0, %v286
  %v288 = vrot.slane %v281, %v287
  %v289 = vsub.f32 %v272, %v288
  %v290 = vmul.f32 %v289, 1.442695
  %v291 = vpow.pop %v290
  %v292 = vld [vmem:[#allocation3 + $0x2] sm:$0x1]
  %v293 = vmul.f32 %v284, %v292
  %v294 = vsel %vm73, %v291, 0.0
  %v295 = vrot.slane %v294, 4
  %v296 = vadd.f32 %v294, %v295
  %v297 = vrot.slane %v296, 2
  %v298 = vadd.f32 %v296, %v297
  %v299 = vrot.slane %v298, 1
  %v300 = vadd.f32 %v298, %v299
  %v301 = vadd.f32 %v293, %v300
  %302 = vst.msk [vmem:[#allocation3 + $0x2] sm:$0x1] %vm102, %v301
  %v303 = vpack.c.bf16 %v291, %v291
  %v305 = vsel %vm73, %v54, 0
  %v308 = vsel %vm108, %v303, 0
  %310 = vmatprep.subr.bf16.mxu0 0
  %311 = vmatpush1.bf16.msra.mxu0 %v308
  %312 = vmatprep.subr.bf16.mxu0 0
  %313 = vmatpush1.bf16.msra.mxu0 0
  %314 = vmatprep.subr.bf16.mxu0 0
  %315 = vmatpush1.bf16.msra.mxu0 0
  %316 = vmatprep.subr.bf16.mxu0 0
  %317 = vmatpush1.bf16.msra.mxu0 0
  %318 = vmatprep.subr.bf16.mxu0 0
  %319 = vmatpush1.bf16.msra.mxu0 0
  %320 = vmatprep.subr.bf16.mxu0 0
  %321 = vmatpush1.bf16.msra.mxu0 0
  %322 = vmatprep.subr.bf16.mxu0 0
  %323 = vmatpush1.bf16.msra.mxu0 0
  %324 = vmatprep.subr.bf16.mxu0 0
  %325 = vmatpush1.bf16.msra.mxu0 0
  %326 = vmatprep.subr.bf16.mxu0 0
  %327 = vmatpush1.bf16.msra.mxu0 0
  %328 = vmatprep.subr.bf16.mxu0 0
  %329 = vmatpush1.bf16.msra.mxu0 0
  %330 = vmatprep.subr.bf16.mxu0 0
  %331 = vmatpush1.bf16.msra.mxu0 0
  %332 = vmatprep.subr.bf16.mxu0 0
  %333 = vmatpush1.bf16.msra.mxu0 0
  %334 = vmatprep.subr.bf16.mxu0 0
  %335 = vmatpush1.bf16.msra.mxu0 0
  %336 = vmatprep.subr.bf16.mxu0 0
  %337 = vmatpush1.bf16.msra.mxu0 0
  %338 = vmatprep.subr.bf16.mxu0 0
  %339 = vmatpush1.bf16.msra.mxu0 0
  %340 = vmatprep.subr.bf16.mxu0 0
  %341 = vmatpush1.bf16.msra.mxu0 0
  %342 = vmatprep.mubr.bf16.mxu0 0
  %343 = vmatmul.mubr.bf16.gmra.mrb[0].mxu0 %v305
  %v344 = vpop.f32.mrb[0].mxu0
  %v345 = vadd.f32 0.0, %v344
  %v346 = vpop.f32.mrb[0].mxu0
  %v347 = vpop.f32.mrb[0].mxu0
  %v348 = vpop.f32.mrb[0].mxu0
  %349 = vdwg.mxu0
  %v350 = vld [vmem:[#allocation4 + $0x10] sm:$0xff]
  %v351 = vlaneseq
  %v352 = vshrl.u32 %v351, 7
  %v353 = vsub.s32 0, %v352
  %v354 = vrot.slane %v284, %v353
  %v355 = vmul.f32 %v354, %v350
  %v356 = vadd.f32 %v355, %v345
  %357 = vst.msk [vmem:[#allocation4 + $0x10] sm:$0xff] %vm73, %v356
  %358 = vst.msk [vmem:[#allocation2 + $0x2] sm:$0x1] %vm102, %v281
  // Predicated region
  $region26: #{hidden_gat_encoder.2} parent=0 // pred_check
    %p359 = pneg %p23
  $region27: #{hidden_gat_encoder.2} parent=0 // pred_check_branch
    %361 = sbr.rel (%p359) target = $region29
  $region28: #{hidden_gat_encoder.2} parent=0 // pred_region
    %v362 = vld [vmem:[#allocation3] sm:$0x7]
    %v363 = vrcp.pop %v362
    %v364 = vmul.f32 1.0, %v363
    %v365 = vld [vmem:[%s4] sm:$0xff]
    %v366 = vld [vmem:[%s4 + $0x8] sm:$0xff]
    %v367 = vld [vmem:[%s4 + $0x10] sm:$0xff]
    %v368 = vld [vmem:[#allocation4] sm:$0xff]
    %v369 = vlaneseq
    %v370 = vshrl.u32 %v369, 7
    %v371 = vsub.s32 0, %v370
    %v372 = vrot.slane %v364, %v371
    %v373 = vmul.f32 %v368, %v372
    %v374 = vadd.f32 %v373, 0.0
    %376 = vset.pattern.permute.xlu0 0
    %377 = vperm.xlu0 %376, %v365
    %v378 = vpop.permute.xlu0 %377
    %v380 = vadd.f32 %v374, %v378
    %v381 = vmax.f32 %v380, 0.0
    %382 = vst.msk [vmem:[%s5] sm:$0xff] %vm73, %v381
    %v383 = vld [vmem:[#allocation4 + $0x8] sm:$0xff]
    %v384 = vlaneseq
    %v385 = vshrl.u32 %v384, 7
    %v386 = vsub.s32 1, %v385
    %v387 = vrot.slane %v364, %v386
    %v388 = vmul.f32 %v383, %v387
    %v389 = vadd.f32 %v388, 0.0
    %391 = vset.pattern.permute.xlu0 0
    %392 = vperm.xlu0 %391, %v366
    %v393 = vpop.permute.xlu0 %392
    %v395 = vadd.f32 %v389, %v393
    %v396 = vmax.f32 %v395, 0.0
    %397 = vst.msk [vmem:[%s5 + $0x8] sm:$0xff] %vm73, %v396
    %v398 = vld [vmem:[#allocation4 + $0x10] sm:$0xff]
    %v399 = vlaneseq
    %v400 = vshrl.u32 %v399, 7
    %v401 = vsub.s32 2, %v400
    %v402 = vrot.slane %v364, %v401
    %v403 = vmul.f32 %v398, %v402
    %v404 = vadd.f32 %v403, 0.0
    %406 = vset.pattern.permute.xlu0 0
    %407 = vperm.xlu0 %406, %v367
    %v408 = vpop.permute.xlu0 %407
    %v410 = vadd.f32 %v404, %v408
    %v411 = vmax.f32 %v410, 0.0
    %412 = vst.msk [vmem:[%s5 + $0x10] sm:$0xff] %vm73, %v411
  $region29: #{hidden_gat_encoder.2} parent=0 // pred_fallthru
    _
  // Predicated region
  $region30: #{hidden_gat_encoder.2} parent=0 // pred_check
    _
  $region31: #{hidden_gat_encoder.2} parent=0 // pred_check_branch
    %414 = sbr.rel (0) target = $region33
  $region32: #{hidden_gat_encoder.2} parent=0 // pred_region
    _
  $region33: #{hidden_gat_encoder.2} parent=0 // pred_fallthru
    _
  // Predicated region
  $region34: #{hidden_gat_encoder.2} parent=0 // pred_check
    _
  $region35: #{hidden_gat_encoder.2} parent=0 // pred_check_branch
    %416 = sbr.rel (0) target = $region37
  $region36: #{hidden_gat_encoder.2} parent=0 // pred_region
    _
  $region37: #{hidden_gat_encoder.2} parent=0 // pred_fallthru
    _

</llo_original>
